<compile_context>
chip_gen: v5e
topology: v5e:2x2
jax: 0.10.0
libtpu: 0.0.40
codegen_flags: <defaults>
</compile_context>

<pallas_src>
import functools

import jax
import jax.numpy as jnp
from jax.experimental import pallas as pl
from jax.experimental.pallas import tpu as pltpu

INPUT_SIZE = 784
HIDDEN_SIZE = 500
NUM_CLASSES = 10
HIDDEN_PAD = 512   # hidden padded to 4 full 128-lane tiles (no ragged tail)
OUT_PAD = 128      # lane-dense padded output width (>= NUM_CLASSES)


def _round_up(x, m):
    return (x + m - 1) // m * m


def _mlp_kernel(x_ref, w1_ref, b1_ref, w2_ref, b2_ref, o_ref):
    # x_ref:  (bm, 784)          f32  (cast to bf16 in-kernel; halves x HBM traffic)
    # w1_ref: (784, HIDDEN_PAD)  bf16 (VMEM-resident across grid steps; cols 500.. = 0)
    # b1_ref: (1, HIDDEN_PAD)    f32  (cols 500.. = 0)
    # w2_ref: (HIDDEN_PAD, 128)  bf16 (rows 500.. and cols 10.. = 0)
    # b2_ref: (1, 128)           f32  (cols 10.. = 0)
    # o_ref:  (bm, 128)          f32
    x_bf = x_ref[...].astype(jnp.bfloat16)           # VPU cast, hidden under the MXU
    h = jnp.dot(x_bf, w1_ref[...], preferred_element_type=jnp.float32)
    h = jnp.maximum(h + b1_ref[...], 0.0)             # bias + ReLU on the VPU
    out = jnp.dot(h.astype(jnp.bfloat16), w2_ref[...],
                  preferred_element_type=jnp.float32)
    o_ref[...] = out + b2_ref[...]


def prepare_params(w1, b1, w2, b2):
    """One-time parameter prep (bf16 cast + lane padding). Call once, reuse.

    w1: (784, 500), b1: (1, 500) or (500,), w2: (500, 10), b2: (1, 10) or (10,)
    """
    w1p = jnp.pad(w1.astype(jnp.bfloat16),
                  ((0, 0), (0, HIDDEN_PAD - HIDDEN_SIZE)))
    b1p = jnp.pad(b1.reshape(1, HIDDEN_SIZE).astype(jnp.float32),
                  ((0, 0), (0, HIDDEN_PAD - HIDDEN_SIZE)))
    w2p = jnp.pad(w2.astype(jnp.bfloat16),
                  ((0, HIDDEN_PAD - HIDDEN_SIZE), (0, OUT_PAD - NUM_CLASSES)))
    b2p = jnp.pad(b2.reshape(1, NUM_CLASSES).astype(jnp.float32),
                  ((0, 0), (0, OUT_PAD - NUM_CLASSES)))
    return w1p, b1p, w2p, b2p


@functools.partial(jax.jit, static_argnames=("block_b",))
def net_forward(x, w1p, b1p, w2p, b2p, *, block_b=1024):
    """Forward pass of Net. x: (B, 784) f32 -> (B, 10) f32.

    Params must come from prepare_params(). block_b: max batch-tile (rows per
    grid step); 1024 keeps the double-buffered f32 x tiles + resident weights
    well under the scoped VMEM limit on v5e/v6e/v7x while amortizing the
    ~0.35 us per-grid-step overhead.
    """
    B, D = x.shape
    assert D == INPUT_SIZE

    # Batch tile: multiple of 16 (bf16 packs two rows per sublane).
    bm = _round_up(min(block_b, _round_up(B, 16)), 16)
    # Guarantee >= 2 grid steps when the batch allows it, so the "parallel"
    # batch axis actually splits across both TensorCores on v7x.
    if B > 16 and _round_up(B, bm) // bm < 2:
        bm = _round_up((_round_up(B, 16) + 1) // 2, 16)
    B_pad = _round_up(B, bm)

    x_pad = x if B_pad == B else jnp.pad(x, ((0, B_pad - B), (0, 0)))

    grid = (B_pad // bm,)
    out_padded = pl.pallas_call(
        _mlp_kernel,
        out_shape=jax.ShapeDtypeStruct((B_pad, OUT_PAD), jnp.float32),
        grid_spec=pltpu.PrefetchScalarGridSpec(
            num_scalar_prefetch=0,
            grid=grid,
            in_specs=[
                pl.BlockSpec((bm, INPUT_SIZE), lambda i: (i, 0)),             # x tile (f32)
                pl.BlockSpec((INPUT_SIZE, HIDDEN_PAD), lambda i: (0, 0)),     # W1 (resident)
                pl.BlockSpec((1, HIDDEN_PAD), lambda i: (0, 0)),              # b1
                pl.BlockSpec((HIDDEN_PAD, OUT_PAD), lambda i: (0, 0)),        # W2 (padded)
                pl.BlockSpec((1, OUT_PAD), lambda i: (0, 0)),                 # b2 (padded)
            ],
            out_specs=pl.BlockSpec((bm, OUT_PAD), lambda i: (i, 0)),
        ),
        compiler_params=pltpu.CompilerParams(
            dimension_semantics=("parallel",),      # batch tiles shard across TCs on v7x
            vmem_limit_bytes=32 * 1024 * 1024,      # ~12 MB working set at bm=1024
        ),
    )(x_pad, w1p, b1p, w2p, b2p)

    return out_padded[:B, :NUM_CLASSES]


def init_params(key):
    """Deterministic init mirroring nn.Linear's default U(-1/sqrt(fan_in), 1/sqrt(fan_in))."""
    k1, k2, k3, k4 = jax.random.split(key, 4)
    bound1 = 1.0 / jnp.sqrt(jnp.float32(INPUT_SIZE))
    bound2 = 1.0 / jnp.sqrt(jnp.float32(HIDDEN_SIZE))
    # stored as (in_features, out_features) — transposed vs torch's (out, in)
    w1 = jax.random.uniform(k1, (INPUT_SIZE, HIDDEN_SIZE), jnp.float32, -bound1, bound1)
    b1 = jax.random.uniform(k2, (1, HIDDEN_SIZE), jnp.float32, -bound1, bound1)
    w2 = jax.random.uniform(k3, (HIDDEN_SIZE, NUM_CLASSES), jnp.float32, -bound2, bound2)
    b2 = jax.random.uniform(k4, (1, NUM_CLASSES), jnp.float32, -bound2, bound2)
    return w1, b1, w2, b2


def _reference(x, w1, b1, w2, b2):
    """Same arithmetic as the kernel (bf16 operands, f32 accumulation), plain JAX.

    Note: x/W1/W2/h are intentionally quantized to bf16 for the MXU; this is a
    documented inference-precision choice vs. the f32 PyTorch reference.
    """
    xb, w1b, w2b = (a.astype(jnp.bfloat16) for a in (x, w1, w2))
    h = jnp.maximum(jnp.dot(xb, w1b, preferred_element_type=jnp.float32) + b1, 0.0)
    return jnp.dot(h.astype(jnp.bfloat16), w2b, preferred_element_type=jnp.float32) + b2


if __name__ == "__main__":
    key = jax.random.PRNGKey(0)
    pkey, xkey = jax.random.split(key)
    w1, b1, w2, b2 = init_params(pkey)
    params = prepare_params(w1, b1, w2, b2)   # one-time cast + pad

    # Small, deterministic test batch.
    batch = 8
    x = jax.random.normal(xkey, (batch, INPUT_SIZE), jnp.float32)

    out = jax.block_until_ready(net_forward(x, *params))
    assert out.shape == (batch, NUM_CLASSES)

    ref = _reference(x, w1, b1, w2, b2)
    assert jnp.allclose(out, ref, atol=2e-2, rtol=2e-2)

    # Coarse sanity check against full-f32 math (bf16 operands => looser tol).
    ref32 = jnp.maximum(x @ w1 + b1, 0.0) @ w2 + b2
    assert jnp.allclose(out, ref32, atol=5e-2, rtol=5e-2)

    # Exercise the non-aligned-batch path (padding + >=2 grid steps: bm=32, grid=2).
    x2 = jax.random.normal(jax.random.PRNGKey(1), (37, INPUT_SIZE), jnp.float32)
    out2 = jax.block_until_ready(net_forward(x2, *params))
    assert out2.shape == (37, NUM_CLASSES)
    assert jnp.allclose(out2, _reference(x2, w1, b1, w2, b2), atol=2e-2, rtol=2e-2)

    print("KERNEL_OK")
</pallas_src>

<mosaic_0001>
module attributes {stable_mosaic.version = 11 : i64} {
  func.func @_mlp_kernel(%arg0: i32, %arg1: memref<16x784xf32, #tpu.memory_space<vmem>>, %arg2: memref<784x512xbf16, #tpu.memory_space<vmem>>, %arg3: memref<1x512xf32, #tpu.memory_space<vmem>>, %arg4: memref<512x128xbf16, #tpu.memory_space<vmem>>, %arg5: memref<1x128xf32, #tpu.memory_space<vmem>>, %arg6: memref<16x128xf32, #tpu.memory_space<vmem>>) attributes {dimension_semantics = [#tpu.dimension_semantics<parallel>], iteration_bounds = array<i64: 1>, scalar_prefetch = 0 : i64, scratch_operands = 0 : i64, tpu.core_type = #tpu.core_type<tc>, window_params = [{transform_indices = @transform_0, window_bounds = array<i64: 16, 784>}, {pipeline_mode = #tpu.pipeline_mode<synchronous>, transform_indices = @transform_1, window_bounds = array<i64: 784, 512>}, {pipeline_mode = #tpu.pipeline_mode<synchronous>, transform_indices = @transform_2, window_bounds = array<i64: 1, 512>}, {pipeline_mode = #tpu.pipeline_mode<synchronous>, transform_indices = @transform_3, window_bounds = array<i64: 512, 128>}, {pipeline_mode = #tpu.pipeline_mode<synchronous>, transform_indices = @transform_4, window_bounds = array<i64: 1, 128>}, {transform_indices = @transform_5, window_bounds = array<i64: 16, 128>}]} {
    %c0 = arith.constant 0 : index
    %c0_0 = arith.constant 0 : index
    %0 = vector.load %arg1[%c0, %c0_0] : memref<16x784xf32, #tpu.memory_space<vmem>>, vector<16x784xf32>
    %1 = arith.truncf %0 : vector<16x784xf32> to vector<16x784xbf16>
    %c0_1 = arith.constant 0 : index
    %c0_2 = arith.constant 0 : index
    %2 = vector.load %arg2[%c0_1, %c0_2] : memref<784x512xbf16, #tpu.memory_space<vmem>>, vector<784x512xbf16>
    %cst = arith.constant dense<0.000000e+00> : vector<16x512xf32>
    %3 = tpu.matmul %1, %2, %cst {dimension_numbers = #tpu.dot_dimension_numbers<[1], [0], [0], [1], [0, 0, 1, 1], [], []>} : vector<16x784xbf16>, vector<784x512xbf16>, vector<16x512xf32> -> vector<16x512xf32>
    %c0_3 = arith.constant 0 : index
    %c0_4 = arith.constant 0 : index
    %4 = vector.load %arg3[%c0_3, %c0_4] : memref<1x512xf32, #tpu.memory_space<vmem>>, vector<1x512xf32>
    %5 = vector.broadcast %4 : vector<1x512xf32> to vector<16x512xf32>
    %6 = arith.addf %3, %5 : vector<16x512xf32>
    %cst_5 = arith.constant 0.000000e+00 : f32
    %7 = vector.broadcast %cst_5 : f32 to vector<16x512xf32>
    %8 = arith.maximumf %6, %7 : vector<16x512xf32>
    %9 = arith.truncf %8 : vector<16x512xf32> to vector<16x512xbf16>
    %c0_6 = arith.constant 0 : index
    %c0_7 = arith.constant 0 : index
    %10 = vector.load %arg4[%c0_6, %c0_7] : memref<512x128xbf16, #tpu.memory_space<vmem>>, vector<512x128xbf16>
    %cst_8 = arith.constant dense<0.000000e+00> : vector<16x128xf32>
    %11 = tpu.matmul %9, %10, %cst_8 {dimension_numbers = #tpu.dot_dimension_numbers<[1], [0], [0], [1], [0, 0, 1, 1], [], []>} : vector<16x512xbf16>, vector<512x128xbf16>, vector<16x128xf32> -> vector<16x128xf32>
    %c0_9 = arith.constant 0 : index
    %c0_10 = arith.constant 0 : index
    %12 = vector.load %arg5[%c0_9, %c0_10] : memref<1x128xf32, #tpu.memory_space<vmem>>, vector<1x128xf32>
    %13 = vector.broadcast %12 : vector<1x128xf32> to vector<16x128xf32>
    %14 = arith.addf %11, %13 : vector<16x128xf32>
    %c0_11 = arith.constant 0 : index
    %c0_12 = arith.constant 0 : index
    %15 = vector.load %arg6[%c0_11, %c0_12] : memref<16x128xf32, #tpu.memory_space<vmem>>, vector<16x128xf32>
    tpu.vector_store %arg6[%c0_11, %c0_12], %14 {strides = array<i32>} : memref<16x128xf32, #tpu.memory_space<vmem>>, vector<16x128xf32>,
    return
  }
  func.func @transform_0(%arg0: i32) -> (i32, i32) {
    %c0_i32 = arith.constant 0 : i32
    %c0_i32_0 = arith.constant 0 : i32
    return %arg0, %c0_i32 : i32, i32
  }
  func.func @transform_1(%arg0: i32) -> (i32, i32) {
    %c0_i32 = arith.constant 0 : i32
    %c0_i32_0 = arith.constant 0 : i32
    %c0_i32_1 = arith.constant 0 : i32
    return %c0_i32, %c0_i32_0 : i32, i32
  }
  func.func @transform_2(%arg0: i32) -> (i32, i32) {
    %c0_i32 = arith.constant 0 : i32
    %c0_i32_0 = arith.constant 0 : i32
    %c0_i32_1 = arith.constant 0 : i32
    return %c0_i32, %c0_i32_0 : i32, i32
  }
  func.func @transform_3(%arg0: i32) -> (i32, i32) {
    %c0_i32 = arith.constant 0 : i32
    %c0_i32_0 = arith.constant 0 : i32
    %c0_i32_1 = arith.constant 0 : i32
    return %c0_i32, %c0_i32_0 : i32, i32
  }
  func.func @transform_4(%arg0: i32) -> (i32, i32) {
    %c0_i32 = arith.constant 0 : i32
    %c0_i32_0 = arith.constant 0 : i32
    %c0_i32_1 = arith.constant 0 : i32
    return %c0_i32, %c0_i32_0 : i32, i32
  }
  func.func @transform_5(%arg0: i32) -> (i32, i32) {
    %c0_i32 = arith.constant 0 : i32
    %c0_i32_0 = arith.constant 0 : i32
    return %arg0, %c0_i32 : i32, i32
  }
}

</mosaic_0001>

<llo_original>
// kernel: net_forward.1
$region0: #{net_forward.1}
  #allocation0 [shape = 'u32[]', space=smem, size = 0x4, offset = 0x4, fixed_abs, tag = 'smem constant byte address 0x4 - core index']
  #allocation1 [shape = 'u32[72,128]{1,0:T(1,128)}', space=vmem, size = 0x9000, scoped, tag = 'internal scratch']
  %s0 = inlined_call_operand.vmem [shape: f32[16,784], index: 0, kind: input, shape index: {}]
  %s1 = inlined_call_operand.hbm [shape: bf16[784,512], index: 1, kind: input, shape index: {}]
  %s2 = inlined_call_operand.vmem [shape: f32[1,512], index: 2, kind: input, shape index: {}]
  %s3 = inlined_call_operand.hbm [shape: bf16[512,128], index: 3, kind: input, shape index: {}]
  %s4 = inlined_call_operand.vmem [shape: f32[1,128], index: 4, kind: input, shape index: {}]
  %s5 = inlined_call_operand.vmem [shape: f32[16,128], index: 5, kind: output, shape index: {}]
  %s6 = sld [smem:[#allocation0]]
  $region38: #{net_forward.1} parent=0
    _
  %s8 = ssub.s32 1, %s6
  %s9 = scalar_select 0, %s8, %s6
  $region1: #{net_forward.1} parent=0
    #allocation2 [shape = 'u8[802816]{0}', space=vmem, size = 0xc4000, scoped, tag = 'input window, operand 1, single buffered']
    #allocation3 [shape = 's32[1]{0}', space=sflag, size = 0x4, scoped, tag = 'scoped memory for net_forward.1']
    #allocation4 [shape = 'u8[131072]{0}', space=vmem, size = 0x20000, scoped, tag = 'input window, operand 3, single buffered']
    #allocation5 [shape = 's32[1]{0}', space=sflag, size = 0x4, scoped, tag = 'scoped memory for net_forward.1']
    %10 = vsyncpa [#allocation3], 0
    %11 = vsyncpa [#allocation5], 0
    // Predicated region
    $region2: #{net_forward.1} parent=1 // pred_check
      _
    $region3: #{net_forward.1} parent=1 // pred_check_branch
      %13 = sbr.rel (0) target = $region5
    $region4: #{net_forward.1} parent=1 // pred_region
      _
    $region5: #{net_forward.1} parent=1 // pred_fallthru
      _
    // Predicated region
    $region6: #{net_forward.1} parent=1 // pred_check
      _
    $region7: #{net_forward.1} parent=1 // pred_check_branch
      %15 = sbr.rel (0) target = $region9
    $region8: #{net_forward.1} parent=1 // pred_region
      %17 = vsyncadd [#allocation3], 0
      %s18 = sshll.u32 %s1, 4
      %s19 = int_to_ptr.hbm [resolvable:$true] %s18
      %s20 = sshll.u32 [#allocation2], 4
      %s21 = int_to_ptr.vmem [resolvable:$true] %s20
      %26 = dma.hbm_to_vmem [thread:$0]  %s19, 25088, %s21, [#allocation3], 256, 256, 16
    $region9: #{net_forward.1} parent=1 // pred_fallthru
      _
    // Predicated region
    $region10: #{net_forward.1} parent=1 // pred_check
      _
    $region11: #{net_forward.1} parent=1 // pred_check_branch
      %28 = sbr.rel (0) target = $region13
    $region12: #{net_forward.1} parent=1 // pred_region
      _
    $region13: #{net_forward.1} parent=1 // pred_fallthru
      _
    // Predicated region
    $region14: #{net_forward.1} parent=1 // pred_check
      _
    $region15: #{net_forward.1} parent=1 // pred_check_branch
      %30 = sbr.rel (0) target = $region17
    $region16: #{net_forward.1} parent=1 // pred_region
      %32 = vsyncadd [#allocation5], 0
      %s33 = sshll.u32 %s3, 4
      %s34 = int_to_ptr.hbm [resolvable:$true] %s33
      %s35 = sshll.u32 [#allocation4], 4
      %s36 = int_to_ptr.vmem [resolvable:$true] %s35
      %41 = dma.hbm_to_vmem [thread:$0]  %s34, 4096, %s36, [#allocation5], 64, 64, 4
    $region17: #{net_forward.1} parent=1 // pred_fallthru
      _
    // Predicated region
    $region18: #{net_forward.1} parent=1 // pred_check
      _
    $region19: #{net_forward.1} parent=1 // pred_check_branch
      %43 = sbr.rel (0) target = $region21
    $region20: #{net_forward.1} parent=1 // pred_region
      _
    $region21: #{net_forward.1} parent=1 // pred_fallthru
      _
    // Predicated region
    $region22: #{net_forward.1} parent=1 // pred_check
      _
    $region23: #{net_forward.1} parent=1 // pred_check_branch
      %45 = sbr.rel (0) target = $region25
    $region24: #{net_forward.1} parent=1 // pred_region
      %47 = dma.done [#allocation3], 25088
    $region25: #{net_forward.1} parent=1 // pred_fallthru
      _
    // Predicated region
    $region26: #{net_forward.1} parent=1 // pred_check
      _
    $region27: #{net_forward.1} parent=1 // pred_check_branch
      %49 = sbr.rel (0) target = $region29
    $region28: #{net_forward.1} parent=1 // pred_region
      %51 = dma.done [#allocation5], 4096
    $region29: #{net_forward.1} parent=1 // pred_fallthru
      _
    %v53 = vld [vmem:[%s0] sm:$0xff]
    %v54 = vld [vmem:[%s0 + $0x8] sm:$0xff]
    %v55 = vld [vmem:[%s0 + $0x10] sm:$0xff]
    %v56 = vld [vmem:[%s0 + $0x18] sm:$0xff]
    %v57 = vld [vmem:[%s0 + $0x20] sm:$0xff]
    %v58 = vld [vmem:[%s0 + $0x28] sm:$0xff]
    %v59 = vld [vmem:[%s0 + $0x30] sm:$0xff]
    %v60 = vld [vmem:[%s0 + $0x38] sm:$0xff]
    %v61 = vld [vmem:[%s0 + $0x40] sm:$0xff]
    %v62 = vld [vmem:[%s0 + $0x48] sm:$0xff]
    %v63 = vld [vmem:[%s0 + $0x50] sm:$0xff]
    %v64 = vld [vmem:[%s0 + $0x58] sm:$0xff]
    %v65 = vld [vmem:[%s0 + $0x60] sm:$0xff]
    %v66 = vld [vmem:[%s0 + $0x68] sm:$0xff]
    %v67 = vpack.c.bf16 %v60, %v53
    %v68 = vpack.c.bf16 %v61, %v54
    %v69 = vpack.c.bf16 %v62, %v55
    %v70 = vpack.c.bf16 %v63, %v56
    %v71 = vpack.c.bf16 %v64, %v57
    %v72 = vpack.c.bf16 %v65, %v58
    %v73 = vpack.c.bf16 %v66, %v59
    %v74 = vld [vmem:[#allocation2] sm:$0xff]
    %v75 = vld [vmem:[#allocation2 + $0x8] sm:$0xff]
    %v76 = vld [vmem:[#allocation2 + $0x10] sm:$0xff]
    %v77 = vld [vmem:[#allocation2 + $0x18] sm:$0xff]
    %v78 = vld [vmem:[#allocation2 + $0x20] sm:$0xff]
    %v79 = vld [vmem:[#allocation2 + $0x28] sm:$0xff]
    %v80 = vld [vmem:[#allocation2 + $0x30] sm:$0xff]
    %v81 = vld [vmem:[#allocation2 + $0x38] sm:$0xff]
    %v82 = vld [vmem:[#allocation2 + $0x40] sm:$0xff]
    %v83 = vld [vmem:[#allocation2 + $0x48] sm:$0xff]
    %v84 = vld [vmem:[#allocation2 + $0x50] sm:$0xff]
    %v85 = vld [vmem:[#allocation2 + $0x58] sm:$0xff]
    %v86 = vld [vmem:[#allocation2 + $0x60] sm:$0xff]
    %v87 = vld [vmem:[#allocation2 + $0x68] sm:$0xff]
    %v88 = vld [vmem:[#allocation2 + $0x70] sm:$0xff]
    %v89 = vld [vmem:[#allocation2 + $0x78] sm:$0xff]
    %v90 = vld [vmem:[#allocation2 + $0x80] sm:$0xff]
    %v91 = vld [vmem:[#allocation2 + $0x88] sm:$0xff]
    %v92 = vld [vmem:[#allocation2 + $0x90] sm:$0xff]
    %v93 = vld [vmem:[#allocation2 + $0x98] sm:$0xff]
    %v94 = vld [vmem:[#allocation2 + $0xa0] sm:$0xff]
    %v95 = vld [vmem:[#allocation2 + $0xa8] sm:$0xff]
    %v96 = vld [vmem:[#allocation2 + $0xb0] sm:$0xff]
    %v97 = vld [vmem:[#allocation2 + $0xb8] sm:$0xff]
    %v98 = vld [vmem:[#allocation2 + $0xc0] sm:$0xff]
    %v99 = vld [vmem:[#allocation2 + $0xc8] sm:$0xff]
    %v100 = vld [vmem:[#allocation2 + $0xd0] sm:$0xff]
    %v101 = vld [vmem:[#allocation2 + $0xd8] sm:$0xff]
    %v102 = vld [vmem:[#allocation2 + $0xe0] sm:$0xff]
    %v103 = vld [vmem:[#allocation2 + $0xe8] sm:$0xff]
    %v104 = vld [vmem:[#allocation2 + $0xf0] sm:$0xff]
    %v105 = vld [vmem:[#allocation2 + $0xf8] sm:$0xff]
    %v106 = vld [vmem:[#allocation2 + $0x100] sm:$0xff]
    %v107 = vld [vmem:[#allocation2 + $0x108] sm:$0xff]
    %v108 = vld [vmem:[#allocation2 + $0x110] sm:$0xff]
    %v109 = vld [vmem:[#allocation2 + $0x118] sm:$0xff]
    %v110 = vld [vmem:[#allocation2 + $0x120] sm:$0xff]
    %v111 = vld [vmem:[#allocation2 + $0x128] sm:$0xff]
    %v112 = vld [vmem:[#allocation2 + $0x130] sm:$0xff]
    %v113 = vld [vmem:[#allocation2 + $0x138] sm:$0xff]
    %v114 = vld [vmem:[#allocation2 + $0x140] sm:$0xff]
    %v115 = vld [vmem:[#allocation2 + $0x148] sm:$0xff]
    %v116 = vld [vmem:[#allocation2 + $0x150] sm:$0xff]
    %v117 = vld [vmem:[#allocation2 + $0x158] sm:$0xff]
    %v118 = vld [vmem:[#allocation2 + $0x160] sm:$0xff]
    %v119 = vld [vmem:[#allocation2 + $0x168] sm:$0xff]
    %v120 = vld [vmem:[#allocation2 + $0x170] sm:$0xff]
    %v121 = vld [vmem:[#allocation2 + $0x178] sm:$0xff]
    %v122 = vld [vmem:[#allocation2 + $0x180] sm:$0xff]
    %v123 = vld [vmem:[#allocation2 + $0x188] sm:$0xff]
    %v124 = vld [vmem:[#allocation2 + $0x190] sm:$0xff]
    %v125 = vld [vmem:[#allocation2 + $0x198] sm:$0xff]
    %v126 = vld [vmem:[#allocation2 + $0x1a0] sm:$0xff]
    %v127 = vld [vmem:[#allocation2 + $0x1a8] sm:$0xff]
    %v128 = vld [vmem:[#allocation2 + $0x1b0] sm:$0xff]
    %v129 = vld [vmem:[#allocation2 + $0x1b8] sm:$0xff]
    %v130 = vld [vmem:[#allocation2 + $0x1c0] sm:$0xff]
    %v131 = vld [vmem:[#allocation2 + $0x1c8] sm:$0xff]
    %v132 = vld [vmem:[#allocation2 + $0x1d0] sm:$0xff]
    %v133 = vld [vmem:[#allocation2 + $0x1d8] sm:$0xff]
    %v134 = vld [vmem:[#allocation2 + $0x1e0] sm:$0xff]
    %v135 = vld [vmem:[#allocation2 + $0x1e8] sm:$0xff]
    %v136 = vld [vmem:[#allocation2 + $0x1f0] sm:$0xff]
    %v137 = vld [vmem:[#allocation2 + $0x1f8] sm:$0xff]
    %v138 = vld [vmem:[#allocation2 + $0x200] sm:$0xff]
    %v139 = vld [vmem:[#allocation2 + $0x208] sm:$0xff]
    %v140 = vld [vmem:[#allocation2 + $0x210] sm:$0xff]
    %v141 = vld [vmem:[#allocation2 + $0x218] sm:$0xff]
    %v142 = vld [vmem:[#allocation2 + $0x220] sm:$0xff]
    %v143 = vld [vmem:[#allocation2 + $0x228] sm:$0xff]
    %v144 = vld [vmem:[#allocation2 + $0x230] sm:$0xff]
    %v145 = vld [vmem:[#allocation2 + $0x238] sm:$0xff]
    %v146 = vld [vmem:[#allocation2 + $0x240] sm:$0xff]
    %v147 = vld [vmem:[#allocation2 + $0x248] sm:$0xff]
    %v148 = vld [vmem:[#allocation2 + $0x250] sm:$0xff]
    %v149 = vld [vmem:[#allocation2 + $0x258] sm:$0xff]
    %v150 = vld [vmem:[#allocation2 + $0x260] sm:$0xff]
    %v151 = vld [vmem:[#allocation2 + $0x268] sm:$0xff]
    %v152 = vld [vmem:[#allocation2 + $0x270] sm:$0xff]
    %v153 = vld [vmem:[#allocation2 + $0x278] sm:$0xff]
    %v154 = vld [vmem:[#allocation2 + $0x280] sm:$0xff]
    %v155 = vld [vmem:[#allocation2 + $0x288] sm:$0xff]
    %v156 = vld [vmem:[#allocation2 + $0x290] sm:$0xff]
    %v157 = vld [vmem:[#allocation2 + $0x298] sm:$0xff]
    %v158 = vld [vmem:[#allocation2 + $0x2a0] sm:$0xff]
    %v159 = vld [vmem:[#allocation2 + $0x2a8] sm:$0xff]
    %v160 = vld [vmem:[#allocation2 + $0x2b0] sm:$0xff]
    %v161 = vld [vmem:[#allocation2 + $0x2b8] sm:$0xff]
    %v162 = vld [vmem:[#allocation2 + $0x2c0] sm:$0xff]
    %v163 = vld [vmem:[#allocation2 + $0x2c8] sm:$0xff]
    %v164 = vld [vmem:[#allocation2 + $0x2d0] sm:$0xff]
    %v165 = vld [vmem:[#allocation2 + $0x2d8] sm:$0xff]
    %v166 = vld [vmem:[#allocation2 + $0x2e0] sm:$0xff]
    %v167 = vld [vmem:[#allocation2 + $0x2e8] sm:$0xff]
    %v168 = vld [vmem:[#allocation2 + $0x2f0] sm:$0xff]
    %v169 = vld [vmem:[#allocation2 + $0x2f8] sm:$0xff]
    %v170 = vld [vmem:[#allocation2 + $0x300] sm:$0xff]
    %v171 = vld [vmem:[#allocation2 + $0x308] sm:$0xff]
    %v172 = vld [vmem:[#allocation2 + $0x310] sm:$0xff]
    %v173 = vld [vmem:[#allocation2 + $0x318] sm:$0xff]
    %v174 = vld [vmem:[#allocation2 + $0x320] sm:$0xff]
    %v175 = vld [vmem:[#allocation2 + $0x328] sm:$0xff]
    %v176 = vld [vmem:[#allocation2 + $0x330] sm:$0xff]
    %v177 = vld [vmem:[#allocation2 + $0x338] sm:$0xff]
    %v178 = vld [vmem:[#allocation2 + $0x340] sm:$0xff]
    %v179 = vld [vmem:[#allocation2 + $0x348] sm:$0xff]
    %v180 = vld [vmem:[#allocation2 + $0x350] sm:$0xff]
    %v181 = vld [vmem:[#allocation2 + $0x358] sm:$0xff]
    %v182 = vld [vmem:[#allocation2 + $0x360] sm:$0xff]
    %v183 = vld [vmem:[#allocation2 + $0x368] sm:$0xff]
    %v184 = vld [vmem:[#allocation2 + $0x370] sm:$0xff]
    %v185 = vld [vmem:[#allocation2 + $0x378] sm:$0xff]
    %v186 = vld [vmem:[#allocation2 + $0x380] sm:$0xff]
    %v187 = vld [vmem:[#allocation2 + $0x388] sm:$0xff]
    %v188 = vld [vmem:[#allocation2 + $0x390] sm:$0xff]
    %v189 = vld [vmem:[#allocation2 + $0x398] sm:$0xff]
    %v190 = vld [vmem:[#allocation2 + $0x3a0] sm:$0xff]
    %v191 = vld [vmem:[#allocation2 + $0x3a8] sm:$0xff]
    %v192 = vld [vmem:[#allocation2 + $0x3b0] sm:$0xff]
    %v193 = vld [vmem:[#allocation2 + $0x3b8] sm:$0xff]
    %v194 = vld [vmem:[#allocation2 + $0x3c0] sm:$0xff]
    %v195 = vld [vmem:[#allocation2 + $0x3c8] sm:$0xff]
    %v196 = vld [vmem:[#allocation2 + $0x3d0] sm:$0xff]
    %v197 = vld [vmem:[#allocation2 + $0x3d8] sm:$0xff]
    %v198 = vld [vmem:[#allocation2 + $0x3e0] sm:$0xff]
    %v199 = vld [vmem:[#allocation2 + $0x3e8] sm:$0xff]
    %v200 = vld [vmem:[#allocation2 + $0x3f0] sm:$0xff]
    %v201 = vld [vmem:[#allocation2 + $0x3f8] sm:$0xff]
    %v202 = vld [vmem:[#allocation2 + $0x400] sm:$0xff]
    %v203 = vld [vmem:[#allocation2 + $0x408] sm:$0xff]
    %v204 = vld [vmem:[#allocation2 + $0x410] sm:$0xff]
    %v205 = vld [vmem:[#allocation2 + $0x418] sm:$0xff]
    %v206 = vld [vmem:[#allocation2 + $0x420] sm:$0xff]
    %v207 = vld [vmem:[#allocation2 + $0x428] sm:$0xff]
    %v208 = vld [vmem:[#allocation2 + $0x430] sm:$0xff]
    %v209 = vld [vmem:[#allocation2 + $0x438] sm:$0xff]
    %v210 = vld [vmem:[#allocation2 + $0x440] sm:$0xff]
    %v211 = vld [vmem:[#allocation2 + $0x448] sm:$0xff]
    %v212 = vld [vmem:[#allocation2 + $0x450] sm:$0xff]
    %v213 = vld [vmem:[#allocation2 + $0x458] sm:$0xff]
    %v214 = vld [vmem:[#allocation2 + $0x460] sm:$0xff]
    %v215 = vld [vmem:[#allocation2 + $0x468] sm:$0xff]
    %v216 = vld [vmem:[#allocation2 + $0x470] sm:$0xff]
    %v217 = vld [vmem:[#allocation2 + $0x478] sm:$0xff]
    %v218 = vld [vmem:[#allocation2 + $0x480] sm:$0xff]
    %v219 = vld [vmem:[#allocation2 + $0x488] sm:$0xff]
    %v220 = vld [vmem:[#allocation2 + $0x490] sm:$0xff]
    %v221 = vld [vmem:[#allocation2 + $0x498] sm:$0xff]
    %v222 = vld [vmem:[#allocation2 + $0x4a0] sm:$0xff]
    %v223 = vld [vmem:[#allocation2 + $0x4a8] sm:$0xff]
    %v224 = vld [vmem:[#allocation2 + $0x4b0] sm:$0xff]
    %v225 = vld [vmem:[#allocation2 + $0x4b8] sm:$0xff]
    %v226 = vld [vmem:[#allocation2 + $0x4c0] sm:$0xff]
    %v227 = vld [vmem:[#allocation2 + $0x4c8] sm:$0xff]
    %v228 = vld [vmem:[#allocation2 + $0x4d0] sm:$0xff]
    %v229 = vld [vmem:[#allocation2 + $0x4d8] sm:$0xff]
    %v230 = vld [vmem:[#allocation2 + $0x4e0] sm:$0xff]
    %v231 = vld [vmem:[#allocation2 + $0x4e8] sm:$0xff]
    %v232 = vld [vmem:[#allocation2 + $0x4f0] sm:$0xff]
    %v233 = vld [vmem:[#allocation2 + $0x4f8] sm:$0xff]
    %v234 = vld [vmem:[#allocation2 + $0x500] sm:$0xff]
    %v235 = vld [vmem:[#allocation2 + $0x508] sm:$0xff]
    %v236 = vld [vmem:[#allocation2 + $0x510] sm:$0xff]
    %v237 = vld [vmem:[#allocation2 + $0x518] sm:$0xff]
    %v238 = vld [vmem:[#allocation2 + $0x520] sm:$0xff]
    %v239 = vld [vmem:[#allocation2 + $0x528] sm:$0xff]
    %v240 = vld [vmem:[#allocation2 + $0x530] sm:$0xff]
    %v241 = vld [vmem:[#allocation2 + $0x538] sm:$0xff]
    %v242 = vld [vmem:[#allocation2 + $0x540] sm:$0xff]
    %v243 = vld [vmem:[#allocation2 + $0x548] sm:$0xff]
    %v244 = vld [vmem:[#allocation2 + $0x550] sm:$0xff]
    %v245 = vld [vmem:[#allocation2 + $0x558] sm:$0xff]
    %v246 = vld [vmem:[#allocation2 + $0x560] sm:$0xff]
    %v247 = vld [vmem:[#allocation2 + $0x568] sm:$0xff]
    %v248 = vld [vmem:[#allocation2 + $0x570] sm:$0xff]
    %v249 = vld [vmem:[#allocation2 + $0x578] sm:$0xff]
    %v250 = vld [vmem:[#allocation2 + $0x580] sm:$0xff]
    %v251 = vld [vmem:[#allocation2 + $0x588] sm:$0xff]
    %v252 = vld [vmem:[#allocation2 + $0x590] sm:$0xff]
    %v253 = vld [vmem:[#allocation2 + $0x598] sm:$0xff]
    %v254 = vld [vmem:[#allocation2 + $0x5a0] sm:$0xff]
    %v255 = vld [vmem:[#allocation2 + $0x5a8] sm:$0xff]
    %v256 = vld [vmem:[#allocation2 + $0x5b0] sm:$0xff]
    %v257 = vld [vmem:[#allocation2 + $0x5b8] sm:$0xff]
    %v258 = vld [vmem:[#allocation2 + $0x5c0] sm:$0xff]
    %v259 = vld [vmem:[#allocation2 + $0x5c8] sm:$0xff]
    %v260 = vld [vmem:[#allocation2 + $0x5d0] sm:$0xff]
    %v261 = vld [vmem:[#allocation2 + $0x5d8] sm:$0xff]
    %v262 = vld [vmem:[#allocation2 + $0x5e0] sm:$0xff]
    %v263 = vld [vmem:[#allocation2 + $0x5e8] sm:$0xff]
    %v264 = vld [vmem:[#allocation2 + $0x5f0] sm:$0xff]
    %v265 = vld [vmem:[#allocation2 + $0x5f8] sm:$0xff]
    %v266 = vld [vmem:[#allocation2 + $0x600] sm:$0xff]
    %v267 = vld [vmem:[#allocation2 + $0x608] sm:$0xff]
    %v268 = vld [vmem:[#allocation2 + $0x610] sm:$0xff]
    %v269 = vld [vmem:[#allocation2 + $0x618] sm:$0xff]
    %v270 = vld [vmem:[%s2] sm:$0xf]
    %v272 = vperm.slane %v270, 0
    %v273 = vperm.slane %v270, 1
    %v274 = vperm.slane %v270, 2
    %v275 = vperm.slane %v270, 3
    %v476 = vunpack.c.l.b16 %v74
    %v477 = vunpack.c.h.b16 %v74
    %v478 = vunpack.c.l.b16 %v75
    %v479 = vunpack.c.h.b16 %v75
    %v480 = vunpack.c.l.b16 %v76
    %v481 = vunpack.c.h.b16 %v76
    %v482 = vunpack.c.l.b16 %v77
    %v483 = vunpack.c.h.b16 %v77
    %v484 = vunpack.c.l.b16 %v78
    %v485 = vunpack.c.h.b16 %v78
    %v486 = vunpack.c.l.b16 %v79
    %v487 = vunpack.c.h.b16 %v79
    %v488 = vunpack.c.l.b16 %v80
    %v489 = vunpack.c.h.b16 %v80
    %v490 = vunpack.c.l.b16 %v81
    %v491 = vunpack.c.h.b16 %v81
    %v492 = vunpack.c.l.b16 %v82
    %v493 = vunpack.c.h.b16 %v82
    %v494 = vunpack.c.l.b16 %v83
    %v495 = vunpack.c.h.b16 %v83
    %v496 = vunpack.c.l.b16 %v84
    %v497 = vunpack.c.h.b16 %v84
    %v498 = vunpack.c.l.b16 %v85
    %v499 = vunpack.c.h.b16 %v85
    %v500 = vunpack.c.l.b16 %v86
    %v501 = vunpack.c.h.b16 %v86
    %v502 = vunpack.c.l.b16 %v87
    %v503 = vunpack.c.h.b16 %v87
    %v504 = vunpack.c.l.b16 %v88
    %v505 = vunpack.c.h.b16 %v88
    %v506 = vunpack.c.l.b16 %v89
    %v507 = vunpack.c.h.b16 %v89
    %v508 = vunpack.c.l.b16 %v90
    %v509 = vunpack.c.h.b16 %v90
    %v510 = vunpack.c.l.b16 %v91
    %v511 = vunpack.c.h.b16 %v91
    %v512 = vunpack.c.l.b16 %v92
    %v513 = vunpack.c.h.b16 %v92
    %v514 = vunpack.c.l.b16 %v93
    %v515 = vunpack.c.h.b16 %v93
    %v516 = vunpack.c.l.b16 %v94
    %v517 = vunpack.c.h.b16 %v94
    %v518 = vunpack.c.l.b16 %v95
    %v519 = vunpack.c.h.b16 %v95
    %v520 = vunpack.c.l.b16 %v96
    %v521 = vunpack.c.h.b16 %v96
    %v522 = vunpack.c.l.b16 %v97
    %v523 = vunpack.c.h.b16 %v97
    %v524 = vunpack.c.l.b16 %v98
    %v525 = vunpack.c.h.b16 %v98
    %v526 = vunpack.c.l.b16 %v99
    %v527 = vunpack.c.h.b16 %v99
    %v528 = vunpack.c.l.b16 %v100
    %v529 = vunpack.c.h.b16 %v100
    %v530 = vunpack.c.l.b16 %v101
    %v531 = vunpack.c.h.b16 %v101
    %v532 = vunpack.c.l.b16 %v102
    %v533 = vunpack.c.h.b16 %v102
    %v534 = vunpack.c.l.b16 %v103
    %v535 = vunpack.c.h.b16 %v103
    %v536 = vunpack.c.l.b16 %v104
    %v537 = vunpack.c.h.b16 %v104
    %v538 = vunpack.c.l.b16 %v105
    %v539 = vunpack.c.h.b16 %v105
    %v540 = vunpack.c.l.b16 %v106
    %v541 = vunpack.c.h.b16 %v106
    %v542 = vunpack.c.l.b16 %v107
    %v543 = vunpack.c.h.b16 %v107
    %v544 = vunpack.c.l.b16 %v108
    %v545 = vunpack.c.h.b16 %v108
    %v546 = vunpack.c.l.b16 %v109
    %v547 = vunpack.c.h.b16 %v109
    %v548 = vunpack.c.l.b16 %v110
    %v549 = vunpack.c.h.b16 %v110
    %v550 = vunpack.c.l.b16 %v111
    %v551 = vunpack.c.h.b16 %v111
    %v552 = vunpack.c.l.b16 %v112
    %v553 = vunpack.c.h.b16 %v112
    %v554 = vunpack.c.l.b16 %v113
    %v555 = vunpack.c.h.b16 %v113
    %v556 = vunpack.c.l.b16 %v114
    %v557 = vunpack.c.h.b16 %v114
    %v558 = vunpack.c.l.b16 %v115
    %v559 = vunpack.c.h.b16 %v115
    %v560 = vunpack.c.l.b16 %v116
    %v561 = vunpack.c.h.b16 %v116
    %v562 = vunpack.c.l.b16 %v117
    %v563 = vunpack.c.h.b16 %v117
    %v564 = vunpack.c.l.b16 %v118
    %v565 = vunpack.c.h.b16 %v118
    %v566 = vunpack.c.l.b16 %v119
    %v567 = vunpack.c.h.b16 %v119
    %v568 = vunpack.c.l.b16 %v120
    %v569 = vunpack.c.h.b16 %v120
    %v570 = vunpack.c.l.b16 %v121
    %v571 = vunpack.c.h.b16 %v121
    %v572 = vunpack.c.l.b16 %v122
    %v573 = vunpack.c.h.b16 %v122
    %v574 = vunpack.c.l.b16 %v123
    %v575 = vunpack.c.h.b16 %v123
    %v576 = vunpack.c.l.b16 %v124
    %v577 = vunpack.c.h.b16 %v124
    %v578 = vunpack.c.l.b16 %v125
    %v579 = vunpack.c.h.b16 %v125
    %v580 = vunpack.c.l.b16 %v126
    %v581 = vunpack.c.h.b16 %v126
    %v582 = vunpack.c.l.b16 %v127
    %v583 = vunpack.c.h.b16 %v127
    %v584 = vunpack.c.l.b16 %v128
    %v585 = vunpack.c.h.b16 %v128
    %v586 = vunpack.c.l.b16 %v129
    %v587 = vunpack.c.h.b16 %v129
    %v588 = vunpack.c.l.b16 %v130
    %v589 = vunpack.c.h.b16 %v130
    %v590 = vunpack.c.l.b16 %v131
    %v591 = vunpack.c.h.b16 %v131
    %v592 = vunpack.c.l.b16 %v132
    %v593 = vunpack.c.h.b16 %v132
    %v594 = vunpack.c.l.b16 %v133
    %v595 = vunpack.c.h.b16 %v133
    %v596 = vunpack.c.l.b16 %v134
    %v597 = vunpack.c.h.b16 %v134
    %v598 = vunpack.c.l.b16 %v135
    %v599 = vunpack.c.h.b16 %v135
    %v600 = vunpack.c.l.b16 %v136
    %v601 = vunpack.c.h.b16 %v136
    %v602 = vunpack.c.l.b16 %v137
    %v603 = vunpack.c.h.b16 %v137
    %v604 = vunpack.c.l.b16 %v138
    %v605 = vunpack.c.h.b16 %v138
    %v606 = vunpack.c.l.b16 %v139
    %v607 = vunpack.c.h.b16 %v139
    %v608 = vunpack.c.l.b16 %v140
    %v609 = vunpack.c.h.b16 %v140
    %v610 = vunpack.c.l.b16 %v141
    %v611 = vunpack.c.h.b16 %v141
    %v612 = vunpack.c.l.b16 %v142
    %v613 = vunpack.c.h.b16 %v142
    %v614 = vunpack.c.l.b16 %v143
    %v615 = vunpack.c.h.b16 %v143
    %v616 = vunpack.c.l.b16 %v144
    %v617 = vunpack.c.h.b16 %v144
    %v618 = vunpack.c.l.b16 %v145
    %v619 = vunpack.c.h.b16 %v145
    %v620 = vunpack.c.l.b16 %v146
    %v621 = vunpack.c.h.b16 %v146
    %v622 = vunpack.c.l.b16 %v147
    %v623 = vunpack.c.h.b16 %v147
    %v624 = vunpack.c.l.b16 %v148
    %v625 = vunpack.c.h.b16 %v148
    %v626 = vunpack.c.l.b16 %v149
    %v627 = vunpack.c.h.b16 %v149
    %v628 = vunpack.c.l.b16 %v150
    %v629 = vunpack.c.h.b16 %v150
    %v630 = vunpack.c.l.b16 %v151
    %v631 = vunpack.c.h.b16 %v151
    %v632 = vunpack.c.l.b16 %v152
    %v633 = vunpack.c.h.b16 %v152
    %v634 = vunpack.c.l.b16 %v153
    %v635 = vunpack.c.h.b16 %v153
    %v636 = vunpack.c.l.b16 %v154
    %v637 = vunpack.c.h.b16 %v154
    %v638 = vunpack.c.l.b16 %v155
    %v639 = vunpack.c.h.b16 %v155
    %v640 = vunpack.c.l.b16 %v156
    %v641 = vunpack.c.h.b16 %v156
    %v642 = vunpack.c.l.b16 %v157
    %v643 = vunpack.c.h.b16 %v157
    %v644 = vunpack.c.l.b16 %v158
    %v645 = vunpack.c.h.b16 %v158
    %v646 = vunpack.c.l.b16 %v159
    %v647 = vunpack.c.h.b16 %v159
    %v648 = vunpack.c.l.b16 %v160
    %v649 = vunpack.c.h.b16 %v160
    %v650 = vunpack.c.l.b16 %v161
    %v651 = vunpack.c.h.b16 %v161
    %v652 = vunpack.c.l.b16 %v162
    %v653 = vunpack.c.h.b16 %v162
    %v654 = vunpack.c.l.b16 %v163
    %v655 = vunpack.c.h.b16 %v163
    %v656 = vunpack.c.l.b16 %v164
    %v657 = vunpack.c.h.b16 %v164
    %v658 = vunpack.c.l.b16 %v165
    %v659 = vunpack.c.h.b16 %v165
    %v660 = vunpack.c.l.b16 %v166
    %v661 = vunpack.c.h.b16 %v166
    %v662 = vunpack.c.l.b16 %v167
    %v663 = vunpack.c.h.b16 %v167
    %v664 = vunpack.c.l.b16 %v168
    %v665 = vunpack.c.h.b16 %v168
    %v666 = vunpack.c.l.b16 %v169
    %v667 = vunpack.c.h.b16 %v169
    %v668 = vunpack.c.l.b16 %v170
    %v669 = vunpack.c.h.b16 %v170
    %v670 = vunpack.c.l.b16 %v171
    %v671 = vunpack.c.h.b16 %v171
    %v672 = vunpack.c.l.b16 %v172
    %v673 = vunpack.c.h.b16 %v172
    %v674 = vunpack.c.l.b16 %v173
    %v675 = vunpack.c.h.b16 %v173
    %v676 = vunpack.c.l.b16 %v174
    %v677 = vunpack.c.h.b16 %v174
    %v678 = vunpack.c.l.b16 %v175
    %v679 = vunpack.c.h.b16 %v175
    %v680 = vunpack.c.l.b16 %v176
    %v681 = vunpack.c.h.b16 %v176
    %v682 = vunpack.c.l.b16 %v177
    %v683 = vunpack.c.h.b16 %v177
    %v684 = vunpack.c.l.b16 %v178
    %v685 = vunpack.c.h.b16 %v178
    %v686 = vunpack.c.l.b16 %v179
    %v687 = vunpack.c.h.b16 %v179
    %v688 = vunpack.c.l.b16 %v180
    %v689 = vunpack.c.h.b16 %v180
    %v690 = vunpack.c.l.b16 %v181
    %v691 = vunpack.c.h.b16 %v181
    %v692 = vunpack.c.l.b16 %v182
    %v693 = vunpack.c.h.b16 %v182
    %v694 = vunpack.c.l.b16 %v183
    %v695 = vunpack.c.h.b16 %v183
    %v696 = vunpack.c.l.b16 %v184
    %v697 = vunpack.c.h.b16 %v184
    %v698 = vunpack.c.l.b16 %v185
    %v699 = vunpack.c.h.b16 %v185
    %v700 = vunpack.c.l.b16 %v186
    %v701 = vunpack.c.h.b16 %v186
    %v702 = vunpack.c.l.b16 %v187
    %v703 = vunpack.c.h.b16 %v187
    %v704 = vunpack.c.l.b16 %v188
    %v705 = vunpack.c.h.b16 %v188
    %v706 = vunpack.c.l.b16 %v189
    %v707 = vunpack.c.h.b16 %v189
    %v708 = vunpack.c.l.b16 %v190
    %v709 = vunpack.c.h.b16 %v190
    %v710 = vunpack.c.l.b16 %v191
    %v711 = vunpack.c.h.b16 %v191
    %v712 = vunpack.c.l.b16 %v192
    %v713 = vunpack.c.h.b16 %v192
    %v714 = vunpack.c.l.b16 %v193
    %v715 = vunpack.c.h.b16 %v193
    %v716 = vunpack.c.l.b16 %v194
    %v717 = vunpack.c.h.b16 %v194
    %v718 = vunpack.c.l.b16 %v195
    %v719 = vunpack.c.h.b16 %v195
    %v720 = vunpack.c.l.b16 %v196
    %v721 = vunpack.c.h.b16 %v196
    %v722 = vunpack.c.l.b16 %v197
    %v723 = vunpack.c.h.b16 %v197
    %v724 = vunpack.c.l.b16 %v198
    %v725 = vunpack.c.h.b16 %v198
    %v726 = vunpack.c.l.b16 %v199
    %v727 = vunpack.c.h.b16 %v199
    %v728 = vunpack.c.l.b16 %v200
    %v729 = vunpack.c.h.b16 %v200
    %v730 = vunpack.c.l.b16 %v201
    %v731 = vunpack.c.h.b16 %v201
    %v732 = vunpack.c.l.b16 %v202
    %v733 = vunpack.c.h.b16 %v202
    %v734 = vunpack.c.l.b16 %v203
    %v735 = vunpack.c.h.b16 %v203
    %v736 = vunpack.c.l.b16 %v204
    %v737 = vunpack.c.h.b16 %v204
    %v738 = vunpack.c.l.b16 %v205
    %v739 = vunpack.c.h.b16 %v205
    %v740 = vunpack.c.l.b16 %v206
    %v741 = vunpack.c.h.b16 %v206
    %v742 = vunpack.c.l.b16 %v207
    %v743 = vunpack.c.h.b16 %v207
    %v744 = vunpack.c.l.b16 %v208
    %v745 = vunpack.c.h.b16 %v208
    %v746 = vunpack.c.l.b16 %v209
    %v747 = vunpack.c.h.b16 %v209
    %v748 = vunpack.c.l.b16 %v210
    %v749 = vunpack.c.h.b16 %v210
    %v750 = vunpack.c.l.b16 %v211
    %v751 = vunpack.c.h.b16 %v211
    %v752 = vunpack.c.l.b16 %v212
    %v753 = vunpack.c.h.b16 %v212
    %v754 = vunpack.c.l.b16 %v213
    %v755 = vunpack.c.h.b16 %v213
    %v756 = vunpack.c.l.b16 %v214
    %v757 = vunpack.c.h.b16 %v214
    %v758 = vunpack.c.l.b16 %v215
    %v759 = vunpack.c.h.b16 %v215
    %v760 = vunpack.c.l.b16 %v216
    %v761 = vunpack.c.h.b16 %v216
    %v762 = vunpack.c.l.b16 %v217
    %v763 = vunpack.c.h.b16 %v217
    %v764 = vunpack.c.l.b16 %v218
    %v765 = vunpack.c.h.b16 %v218
    %v766 = vunpack.c.l.b16 %v219
    %v767 = vunpack.c.h.b16 %v219
    %v768 = vunpack.c.l.b16 %v220
    %v769 = vunpack.c.h.b16 %v220
    %v770 = vunpack.c.l.b16 %v221
    %v771 = vunpack.c.h.b16 %v221
    %v772 = vunpack.c.l.b16 %v222
    %v773 = vunpack.c.h.b16 %v222
    %v774 = vunpack.c.l.b16 %v223
    %v775 = vunpack.c.h.b16 %v223
    %v776 = vunpack.c.l.b16 %v224
    %v777 = vunpack.c.h.b16 %v224
    %v778 = vunpack.c.l.b16 %v225
    %v779 = vunpack.c.h.b16 %v225
    %v780 = vunpack.c.l.b16 %v226
    %v781 = vunpack.c.h.b16 %v226
    %v782 = vunpack.c.l.b16 %v227
    %v783 = vunpack.c.h.b16 %v227
    %v784 = vunpack.c.l.b16 %v228
    %v785 = vunpack.c.h.b16 %v228
    %v786 = vunpack.c.l.b16 %v229
    %v787 = vunpack.c.h.b16 %v229
    %v788 = vunpack.c.l.b16 %v230
    %v789 = vunpack.c.h.b16 %v230
    %v790 = vunpack.c.l.b16 %v231
    %v791 = vunpack.c.h.b16 %v231
    %v792 = vunpack.c.l.b16 %v232
    %v793 = vunpack.c.h.b16 %v232
    %v794 = vunpack.c.l.b16 %v233
    %v795 = vunpack.c.h.b16 %v233
    %v796 = vunpack.c.l.b16 %v234
    %v797 = vunpack.c.h.b16 %v234
    %v798 = vunpack.c.l.b16 %v235
    %v799 = vunpack.c.h.b16 %v235
    %v800 = vunpack.c.l.b16 %v236
    %v801 = vunpack.c.h.b16 %v236
    %v802 = vunpack.c.l.b16 %v237
    %v803 = vunpack.c.h.b16 %v237
    %v804 = vunpack.c.l.b16 %v238
    %v805 = vunpack.c.h.b16 %v238
    %v806 = vunpack.c.l.b16 %v239
    %v807 = vunpack.c.h.b16 %v239
    %v808 = vunpack.c.l.b16 %v240
    %v809 = vunpack.c.h.b16 %v240
    %v810 = vunpack.c.l.b16 %v241
    %v811 = vunpack.c.h.b16 %v241
    %v812 = vunpack.c.l.b16 %v242
    %v813 = vunpack.c.h.b16 %v242
    %v814 = vunpack.c.l.b16 %v243
    %v815 = vunpack.c.h.b16 %v243
    %v816 = vunpack.c.l.b16 %v244
    %v817 = vunpack.c.h.b16 %v244
    %v818 = vunpack.c.l.b16 %v245
    %v819 = vunpack.c.h.b16 %v245
    %v820 = vunpack.c.l.b16 %v246
    %v821 = vunpack.c.h.b16 %v246
    %v822 = vunpack.c.l.b16 %v247
    %v823 = vunpack.c.h.b16 %v247
    %v824 = vunpack.c.l.b16 %v248
    %v825 = vunpack.c.h.b16 %v248
    %v826 = vunpack.c.l.b16 %v249
    %v827 = vunpack.c.h.b16 %v249
    %v828 = vunpack.c.l.b16 %v250
    %v829 = vunpack.c.h.b16 %v250
    %v830 = vunpack.c.l.b16 %v251
    %v831 = vunpack.c.h.b16 %v251
    %v832 = vunpack.c.l.b16 %v252
    %v833 = vunpack.c.h.b16 %v252
    %v834 = vunpack.c.l.b16 %v253
    %v835 = vunpack.c.h.b16 %v253
    %v836 = vunpack.c.l.b16 %v254
    %v837 = vunpack.c.h.b16 %v254
    %v838 = vunpack.c.l.b16 %v255
    %v839 = vunpack.c.h.b16 %v255
    %v840 = vunpack.c.l.b16 %v256
    %v841 = vunpack.c.h.b16 %v256
    %v842 = vunpack.c.l.b16 %v257
    %v843 = vunpack.c.h.b16 %v257
    %v844 = vunpack.c.l.b16 %v258
    %v845 = vunpack.c.h.b16 %v258
    %v846 = vunpack.c.l.b16 %v259
    %v847 = vunpack.c.h.b16 %v259
    %v848 = vunpack.c.l.b16 %v260
    %v849 = vunpack.c.h.b16 %v260
    %v850 = vunpack.c.l.b16 %v261
    %v851 = vunpack.c.h.b16 %v261
    %v852 = vunpack.c.l.b16 %v262
    %v853 = vunpack.c.h.b16 %v262
    %v854 = vunpack.c.l.b16 %v263
    %v855 = vunpack.c.h.b16 %v263
    %v856 = vunpack.c.l.b16 %v264
    %v857 = vunpack.c.h.b16 %v264
    %v858 = vunpack.c.l.b16 %v265
    %v859 = vunpack.c.h.b16 %v265
    %v860 = vunpack.c.l.b16 %v266
    %v861 = vunpack.c.h.b16 %v266
    %v862 = vunpack.c.l.b16 %v267
    %v863 = vunpack.c.h.b16 %v267
    %v864 = vunpack.c.l.b16 %v268
    %v865 = vunpack.c.h.b16 %v268
    %v866 = vunpack.c.l.b16 %v269
    %v867 = vunpack.c.h.b16 %v269
    %v868 = vpack.c.b16 %v480, %v476
    %v869 = vpack.c.b16 %v481, %v477
    %v870 = vpack.c.b16 %v482, %v478
    %v871 = vpack.c.b16 %v483, %v479
    %v872 = vpack.c.b16 %v488, %v484
    %v873 = vpack.c.b16 %v489, %v485
    %v874 = vpack.c.b16 %v490, %v486
    %v875 = vpack.c.b16 %v491, %v487
    %v876 = vpack.c.b16 %v496, %v492
    %v877 = vpack.c.b16 %v497, %v493
    %v878 = vpack.c.b16 %v498, %v494
    %v879 = vpack.c.b16 %v499, %v495
    %v880 = vpack.c.b16 %v504, %v500
    %v881 = vpack.c.b16 %v505, %v501
    %v882 = vpack.c.b16 %v506, %v502
    %v883 = vpack.c.b16 %v507, %v503
    %v884 = vpack.c.b16 %v512, %v508
    %v885 = vpack.c.b16 %v513, %v509
    %v886 = vpack.c.b16 %v514, %v510
    %v887 = vpack.c.b16 %v515, %v511
    %v888 = vpack.c.b16 %v520, %v516
    %v889 = vpack.c.b16 %v521, %v517
    %v890 = vpack.c.b16 %v522, %v518
    %v891 = vpack.c.b16 %v523, %v519
    %v892 = vpack.c.b16 %v528, %v524
    %v893 = vpack.c.b16 %v529, %v525
    %v894 = vpack.c.b16 %v530, %v526
    %v895 = vpack.c.b16 %v531, %v527
    %v896 = vpack.c.b16 %v536, %v532
    %v897 = vpack.c.b16 %v537, %v533
    %v898 = vpack.c.b16 %v538, %v534
    %v899 = vpack.c.b16 %v539, %v535
    %v900 = vpack.c.b16 %v544, %v540
    %v901 = vpack.c.b16 %v545, %v541
    %v902 = vpack.c.b16 %v546, %v542
    %v903 = vpack.c.b16 %v547, %v543
    %v904 = vpack.c.b16 %v552, %v548
    %v905 = vpack.c.b16 %v553, %v549
    %v906 = vpack.c.b16 %v554, %v550
    %v907 = vpack.c.b16 %v555, %v551
    %v908 = vpack.c.b16 %v560, %v556
    %v909 = vpack.c.b16 %v561, %v557
    %v910 = vpack.c.b16 %v562, %v558
    %v911 = vpack.c.b16 %v563, %v559
    %v912 = vpack.c.b16 %v568, %v564
    %v913 = vpack.c.b16 %v569, %v565
    %v914 = vpack.c.b16 %v570, %v566
    %v915 = vpack.c.b16 %v571, %v567
    %v916 = vpack.c.b16 %v576, %v572
    %v917 = vpack.c.b16 %v577, %v573
    %v918 = vpack.c.b16 %v578, %v574
    %v919 = vpack.c.b16 %v579, %v575
    %v920 = vpack.c.b16 %v584, %v580
    %v921 = vpack.c.b16 %v585, %v581
    %v922 = vpack.c.b16 %v586, %v582
    %v923 = vpack.c.b16 %v587, %v583
    %v924 = vpack.c.b16 %v592, %v588
    %v925 = vpack.c.b16 %v593, %v589
    %v926 = vpack.c.b16 %v594, %v590
    %v927 = vpack.c.b16 %v595, %v591
    %v928 = vpack.c.b16 %v600, %v596
    %v929 = vpack.c.b16 %v601, %v597
    %v930 = vpack.c.b16 %v602, %v598
    %v931 = vpack.c.b16 %v603, %v599
    %v932 = vpack.c.b16 %v608, %v604
    %v933 = vpack.c.b16 %v609, %v605
    %v934 = vpack.c.b16 %v610, %v606
    %v935 = vpack.c.b16 %v611, %v607
    %v936 = vpack.c.b16 %v616, %v612
    %v937 = vpack.c.b16 %v617, %v613
    %v938 = vpack.c.b16 %v618, %v614
    %v939 = vpack.c.b16 %v619, %v615
    %v940 = vpack.c.b16 %v624, %v620
    %v941 = vpack.c.b16 %v625, %v621
    %v942 = vpack.c.b16 %v626, %v622
    %v943 = vpack.c.b16 %v627, %v623
    %v944 = vpack.c.b16 %v632, %v628
    %v945 = vpack.c.b16 %v633, %v629
    %v946 = vpack.c.b16 %v634, %v630
    %v947 = vpack.c.b16 %v635, %v631
    %v948 = vpack.c.b16 %v640, %v636
    %v949 = vpack.c.b16 %v641, %v637
    %v950 = vpack.c.b16 %v642, %v638
    %v951 = vpack.c.b16 %v643, %v639
    %v952 = vpack.c.b16 %v648, %v644
    %v953 = vpack.c.b16 %v649, %v645
    %v954 = vpack.c.b16 %v650, %v646
    %v955 = vpack.c.b16 %v651, %v647
    %v956 = vpack.c.b16 %v656, %v652
    %v957 = vpack.c.b16 %v657, %v653
    %v958 = vpack.c.b16 %v658, %v654
    %v959 = vpack.c.b16 %v659, %v655
    %v960 = vpack.c.b16 %v664, %v660
    %v961 = vpack.c.b16 %v665, %v661
    %v962 = vpack.c.b16 %v666, %v662
    %v963 = vpack.c.b16 %v667, %v663
    %v964 = vpack.c.b16 %v672, %v668
    %v965 = vpack.c.b16 %v673, %v669
    %v966 = vpack.c.b16 %v674, %v670
    %v967 = vpack.c.b16 %v675, %v671
    %v968 = vpack.c.b16 %v680, %v676
    %v969 = vpack.c.b16 %v681, %v677
    %v970 = vpack.c.b16 %v682, %v678
    %v971 = vpack.c.b16 %v683, %v679
    %v972 = vpack.c.b16 %v688, %v684
    %v973 = vpack.c.b16 %v689, %v685
    %v974 = vpack.c.b16 %v690, %v686
    %v975 = vpack.c.b16 %v691, %v687
    %v976 = vpack.c.b16 %v696, %v692
    %v977 = vpack.c.b16 %v697, %v693
    %v978 = vpack.c.b16 %v698, %v694
    %v979 = vpack.c.b16 %v699, %v695
    %v980 = vpack.c.b16 %v704, %v700
    %v981 = vpack.c.b16 %v705, %v701
    %v982 = vpack.c.b16 %v706, %v702
    %v983 = vpack.c.b16 %v707, %v703
    %v984 = vpack.c.b16 %v712, %v708
    %v985 = vpack.c.b16 %v713, %v709
    %v986 = vpack.c.b16 %v714, %v710
    %v987 = vpack.c.b16 %v715, %v711
    %v988 = vpack.c.b16 %v720, %v716
    %v989 = vpack.c.b16 %v721, %v717
    %v990 = vpack.c.b16 %v722, %v718
    %v991 = vpack.c.b16 %v723, %v719
    %v992 = vpack.c.b16 %v728, %v724
    %v993 = vpack.c.b16 %v729, %v725
    %v994 = vpack.c.b16 %v730, %v726
    %v995 = vpack.c.b16 %v731, %v727
    %v996 = vpack.c.b16 %v736, %v732
    %v997 = vpack.c.b16 %v737, %v733
    %v998 = vpack.c.b16 %v738, %v734
    %v999 = vpack.c.b16 %v739, %v735
    %v1000 = vpack.c.b16 %v744, %v740
    %v1001 = vpack.c.b16 %v745, %v741
    %v1002 = vpack.c.b16 %v746, %v742
    %v1003 = vpack.c.b16 %v747, %v743
    %v1004 = vpack.c.b16 %v752, %v748
    %v1005 = vpack.c.b16 %v753, %v749
    %v1006 = vpack.c.b16 %v754, %v750
    %v1007 = vpack.c.b16 %v755, %v751
    %v1008 = vpack.c.b16 %v760, %v756
    %v1009 = vpack.c.b16 %v761, %v757
    %v1010 = vpack.c.b16 %v762, %v758
    %v1011 = vpack.c.b16 %v763, %v759
    %v1012 = vpack.c.b16 %v768, %v764
    %v1013 = vpack.c.b16 %v769, %v765
    %v1014 = vpack.c.b16 %v770, %v766
    %v1015 = vpack.c.b16 %v771, %v767
    %v1016 = vpack.c.b16 %v776, %v772
    %v1017 = vpack.c.b16 %v777, %v773
    %v1018 = vpack.c.b16 %v778, %v774
    %v1019 = vpack.c.b16 %v779, %v775
    %v1020 = vpack.c.b16 %v784, %v780
    %v1021 = vpack.c.b16 %v785, %v781
    %v1022 = vpack.c.b16 %v786, %v782
    %v1023 = vpack.c.b16 %v787, %v783
    %v1024 = vpack.c.b16 %v792, %v788
    %v1025 = vpack.c.b16 %v793, %v789
    %v1026 = vpack.c.b16 %v794, %v790
    %v1027 = vpack.c.b16 %v795, %v791
    %v1028 = vpack.c.b16 %v800, %v796
    %v1029 = vpack.c.b16 %v801, %v797
    %v1030 = vpack.c.b16 %v802, %v798
    %v1031 = vpack.c.b16 %v803, %v799
    %v1032 = vpack.c.b16 %v808, %v804
    %v1033 = vpack.c.b16 %v809, %v805
    %v1034 = vpack.c.b16 %v810, %v806
    %v1035 = vpack.c.b16 %v811, %v807
    %v1036 = vpack.c.b16 %v816, %v812
    %v1037 = vpack.c.b16 %v817, %v813
    %v1038 = vpack.c.b16 %v818, %v814
    %v1039 = vpack.c.b16 %v819, %v815
    %v1040 = vpack.c.b16 %v824, %v820
    %v1041 = vpack.c.b16 %v825, %v821
    %v1042 = vpack.c.b16 %v826, %v822
    %v1043 = vpack.c.b16 %v827, %v823
    %v1044 = vpack.c.b16 %v832, %v828
    %v1045 = vpack.c.b16 %v833, %v829
    %v1046 = vpack.c.b16 %v834, %v830
    %v1047 = vpack.c.b16 %v835, %v831
    %v1048 = vpack.c.b16 %v840, %v836
    %v1049 = vpack.c.b16 %v841, %v837
    %v1050 = vpack.c.b16 %v842, %v838
    %v1051 = vpack.c.b16 %v843, %v839
    %v1052 = vpack.c.b16 %v848, %v844
    %v1053 = vpack.c.b16 %v849, %v845
    %v1054 = vpack.c.b16 %v850, %v846
    %v1055 = vpack.c.b16 %v851, %v847
    %v1056 = vpack.c.b16 %v856, %v852
    %v1057 = vpack.c.b16 %v857, %v853
    %v1058 = vpack.c.b16 %v858, %v854
    %v1059 = vpack.c.b16 %v859, %v855
    %v1060 = vpack.c.b16 %v864, %v860
    %v1061 = vpack.c.b16 %v865, %v861
    %v1062 = vpack.c.b16 %v866, %v862
    %v1063 = vpack.c.b16 %v867, %v863
    %vm1260 = vcmask 130048
    %v1262 = vsel %vm1260, %v73, 0
    %1264 = vmatpush.bf16.msra.mxu0 %v896
    %1265 = vmatpush.bf16.msra.mxu0 %v892
    %1266 = vmatpush.bf16.msra.mxu0 %v888
    %1267 = vmatpush.bf16.msra.mxu0 %v884
    %1268 = vmatpush.bf16.msra.mxu0 %v880
    %1269 = vmatpush.bf16.msra.mxu0 %v876
    %1270 = vmatpush.bf16.msra.mxu0 %v872
    %1271 = vmatpush.bf16.msra.mxu0 %v868
    %1272 = vmatmul.bf16.gmra.mxu0 %v67
    %v1273 = vpop.f32.mrf.mxu0
    %v1274 = vadd.f32 %v272, %v1273
    %v1275 = vpop.f32.mrf.mxu0
    %v1276 = vadd.f32 %v272, %v1275
    %1277 = vdwg.mxu0
    %1278 = vmatpush.bf16.msra.mxu0 %v928
    %1279 = vmatpush.bf16.msra.mxu0 %v924
    %1280 = vmatpush.bf16.msra.mxu0 %v920
    %1281 = vmatpush.bf16.msra.mxu0 %v916
    %1282 = vmatpush.bf16.msra.mxu0 %v912
    %1283 = vmatpush.bf16.msra.mxu0 %v908
    %1284 = vmatpush.bf16.msra.mxu0 %v904
    %1285 = vmatpush.bf16.msra.mxu0 %v900
    %1286 = vmatmul.bf16.gmra.mxu0 %v68
    %v1287 = vpop.f32.mrf.mxu0
    %v1288 = vadd.f32 %v1274, %v1287
    %v1289 = vpop.f32.mrf.mxu0
    %v1290 = vadd.f32 %v1276, %v1289
    %1291 = vdwg.mxu0
    %1292 = vmatpush.bf16.msra.mxu0 %v960
    %1293 = vmatpush.bf16.msra.mxu0 %v956
    %1294 = vmatpush.bf16.msra.mxu0 %v952
    %1295 = vmatpush.bf16.msra.mxu0 %v948
    %1296 = vmatpush.bf16.msra.mxu0 %v944
    %1297 = vmatpush.bf16.msra.mxu0 %v940
    %1298 = vmatpush.bf16.msra.mxu0 %v936
    %1299 = vmatpush.bf16.msra.mxu0 %v932
    %1300 = vmatmul.bf16.gmra.mxu0 %v69
    %v1301 = vpop.f32.mrf.mxu0
    %v1302 = vadd.f32 %v1288, %v1301
    %v1303 = vpop.f32.mrf.mxu0
    %v1304 = vadd.f32 %v1290, %v1303
    %1305 = vdwg.mxu0
    %1306 = vmatpush.bf16.msra.mxu0 %v992
    %1307 = vmatpush.bf16.msra.mxu0 %v988
    %1308 = vmatpush.bf16.msra.mxu0 %v984
    %1309 = vmatpush.bf16.msra.mxu0 %v980
    %1310 = vmatpush.bf16.msra.mxu0 %v976
    %1311 = vmatpush.bf16.msra.mxu0 %v972
    %1312 = vmatpush.bf16.msra.mxu0 %v968
    %1313 = vmatpush.bf16.msra.mxu0 %v964
    %1314 = vmatmul.bf16.gmra.mxu0 %v70
    %v1315 = vpop.f32.mrf.mxu0
    %v1316 = vadd.f32 %v1302, %v1315
    %v1317 = vpop.f32.mrf.mxu0
    %v1318 = vadd.f32 %v1304, %v1317
    %1319 = vdwg.mxu0
    %1320 = vmatpush.bf16.msra.mxu0 %v1024
    %1321 = vmatpush.bf16.msra.mxu0 %v1020
    %1322 = vmatpush.bf16.msra.mxu0 %v1016
    %1323 = vmatpush.bf16.msra.mxu0 %v1012
    %1324 = vmatpush.bf16.msra.mxu0 %v1008
    %1325 = vmatpush.bf16.msra.mxu0 %v1004
    %1326 = vmatpush.bf16.msra.mxu0 %v1000
    %1327 = vmatpush.bf16.msra.mxu0 %v996
    %1328 = vmatmul.bf16.gmra.mxu0 %v71
    %v1329 = vpop.f32.mrf.mxu0
    %v1330 = vadd.f32 %v1316, %v1329
    %v1331 = vpop.f32.mrf.mxu0
    %v1332 = vadd.f32 %v1318, %v1331
    %1333 = vdwg.mxu0
    %1334 = vmatpush.bf16.msra.mxu0 %v1056
    %1335 = vmatpush.bf16.msra.mxu0 %v1052
    %1336 = vmatpush.bf16.msra.mxu0 %v1048
    %1337 = vmatpush.bf16.msra.mxu0 %v1044
    %1338 = vmatpush.bf16.msra.mxu0 %v1040
    %1339 = vmatpush.bf16.msra.mxu0 %v1036
    %1340 = vmatpush.bf16.msra.mxu0 %v1032
    %1341 = vmatpush.bf16.msra.mxu0 %v1028
    %1342 = vmatmul.bf16.gmra.mxu0 %v72
    %v1343 = vpop.f32.mrf.mxu0
    %v1344 = vadd.f32 %v1330, %v1343
    %v1345 = vpop.f32.mrf.mxu0
    %v1346 = vadd.f32 %v1332, %v1345
    %1347 = vdwg.mxu0
    %1348 = vmatpush.bf16.msra.mxu0 0
    %1349 = vmatpush.bf16.msra.mxu0 0
    %1350 = vmatpush.bf16.msra.mxu0 0
    %1351 = vmatpush.bf16.msra.mxu0 0
    %1352 = vmatpush.bf16.msra.mxu0 0
    %1353 = vmatpush.bf16.msra.mxu0 0
    %1354 = vmatpush.bf16.msra.mxu0 0
    %1355 = vmatpush.bf16.msra.mxu0 %v1060
    %1356 = vmatmul.bf16.gmra.mxu0 %v1262
    %v1357 = vpop.f32.mrf.mxu0
    %v1358 = vadd.f32 %v1344, %v1357
    %v1359 = vpop.f32.mrf.mxu0
    %v1360 = vadd.f32 %v1346, %v1359
    %1361 = vdwg.mxu0
    %1362 = vmatpush.bf16.msra.mxu0 %v897
    %1363 = vmatpush.bf16.msra.mxu0 %v893
    %1364 = vmatpush.bf16.msra.mxu0 %v889
    %1365 = vmatpush.bf16.msra.mxu0 %v885
    %1366 = vmatpush.bf16.msra.mxu0 %v881
    %1367 = vmatpush.bf16.msra.mxu0 %v877
    %1368 = vmatpush.bf16.msra.mxu0 %v873
    %1369 = vmatpush.bf16.msra.mxu0 %v869
    %1370 = vmatmul.bf16.gmra.mxu0 %v67
    %v1371 = vpop.f32.mrf.mxu0
    %v1372 = vadd.f32 %v273, %v1371
    %v1373 = vpop.f32.mrf.mxu0
    %v1374 = vadd.f32 %v273, %v1373
    %1375 = vdwg.mxu0
    %1376 = vmatpush.bf16.msra.mxu0 %v929
    %1377 = vmatpush.bf16.msra.mxu0 %v925
    %1378 = vmatpush.bf16.msra.mxu0 %v921
    %1379 = vmatpush.bf16.msra.mxu0 %v917
    %1380 = vmatpush.bf16.msra.mxu0 %v913
    %1381 = vmatpush.bf16.msra.mxu0 %v909
    %1382 = vmatpush.bf16.msra.mxu0 %v905
    %1383 = vmatpush.bf16.msra.mxu0 %v901
    %1384 = vmatmul.bf16.gmra.mxu0 %v68
    %v1385 = vpop.f32.mrf.mxu0
    %v1386 = vadd.f32 %v1372, %v1385
    %v1387 = vpop.f32.mrf.mxu0
    %v1388 = vadd.f32 %v1374, %v1387
    %1389 = vdwg.mxu0
    %1390 = vmatpush.bf16.msra.mxu0 %v961
    %1391 = vmatpush.bf16.msra.mxu0 %v957
    %1392 = vmatpush.bf16.msra.mxu0 %v953
    %1393 = vmatpush.bf16.msra.mxu0 %v949
    %1394 = vmatpush.bf16.msra.mxu0 %v945
    %1395 = vmatpush.bf16.msra.mxu0 %v941
    %1396 = vmatpush.bf16.msra.mxu0 %v937
    %1397 = vmatpush.bf16.msra.mxu0 %v933
    %1398 = vmatmul.bf16.gmra.mxu0 %v69
    %v1399 = vpop.f32.mrf.mxu0
    %v1400 = vadd.f32 %v1386, %v1399
    %v1401 = vpop.f32.mrf.mxu0
    %v1402 = vadd.f32 %v1388, %v1401
    %1403 = vdwg.mxu0
    %1404 = vmatpush.bf16.msra.mxu0 %v993
    %1405 = vmatpush.bf16.msra.mxu0 %v989
    %1406 = vmatpush.bf16.msra.mxu0 %v985
    %1407 = vmatpush.bf16.msra.mxu0 %v981
    %1408 = vmatpush.bf16.msra.mxu0 %v977
    %1409 = vmatpush.bf16.msra.mxu0 %v973
    %1410 = vmatpush.bf16.msra.mxu0 %v969
    %1411 = vmatpush.bf16.msra.mxu0 %v965
    %1412 = vmatmul.bf16.gmra.mxu0 %v70
    %v1413 = vpop.f32.mrf.mxu0
    %v1414 = vadd.f32 %v1400, %v1413
    %v1415 = vpop.f32.mrf.mxu0
    %v1416 = vadd.f32 %v1402, %v1415
    %1417 = vdwg.mxu0
    %1418 = vmatpush.bf16.msra.mxu0 %v1025
    %1419 = vmatpush.bf16.msra.mxu0 %v1021
    %1420 = vmatpush.bf16.msra.mxu0 %v1017
    %1421 = vmatpush.bf16.msra.mxu0 %v1013
    %1422 = vmatpush.bf16.msra.mxu0 %v1009
    %1423 = vmatpush.bf16.msra.mxu0 %v1005
    %1424 = vmatpush.bf16.msra.mxu0 %v1001
    %1425 = vmatpush.bf16.msra.mxu0 %v997
    %1426 = vmatmul.bf16.gmra.mxu0 %v71
    %v1427 = vpop.f32.mrf.mxu0
    %v1428 = vadd.f32 %v1414, %v1427
    %v1429 = vpop.f32.mrf.mxu0
    %v1430 = vadd.f32 %v1416, %v1429
    %1431 = vdwg.mxu0
    %1432 = vmatpush.bf16.msra.mxu0 %v1057
    %1433 = vmatpush.bf16.msra.mxu0 %v1053
    %1434 = vmatpush.bf16.msra.mxu0 %v1049
    %1435 = vmatpush.bf16.msra.mxu0 %v1045
    %1436 = vmatpush.bf16.msra.mxu0 %v1041
    %1437 = vmatpush.bf16.msra.mxu0 %v1037
    %1438 = vmatpush.bf16.msra.mxu0 %v1033
    %1439 = vmatpush.bf16.msra.mxu0 %v1029
    %1440 = vmatmul.bf16.gmra.mxu0 %v72
    %v1441 = vpop.f32.mrf.mxu0
    %v1442 = vadd.f32 %v1428, %v1441
    %v1443 = vpop.f32.mrf.mxu0
    %v1444 = vadd.f32 %v1430, %v1443
    %1445 = vdwg.mxu0
    %1446 = vmatpush.bf16.msra.mxu0 0
    %1447 = vmatpush.bf16.msra.mxu0 0
    %1448 = vmatpush.bf16.msra.mxu0 0
    %1449 = vmatpush.bf16.msra.mxu0 0
    %1450 = vmatpush.bf16.msra.mxu0 0
    %1451 = vmatpush.bf16.msra.mxu0 0
    %1452 = vmatpush.bf16.msra.mxu0 0
    %1453 = vmatpush.bf16.msra.mxu0 %v1061
    %1454 = vmatmul.bf16.gmra.mxu0 %v1262
    %v1455 = vpop.f32.mrf.mxu0
    %v1456 = vadd.f32 %v1442, %v1455
    %v1457 = vpop.f32.mrf.mxu0
    %v1458 = vadd.f32 %v1444, %v1457
    %1459 = vdwg.mxu0
    %1460 = vmatpush.bf16.msra.mxu0 %v898
    %1461 = vmatpush.bf16.msra.mxu0 %v894
    %1462 = vmatpush.bf16.msra.mxu0 %v890
    %1463 = vmatpush.bf16.msra.mxu0 %v886
    %1464 = vmatpush.bf16.msra.mxu0 %v882
    %1465 = vmatpush.bf16.msra.mxu0 %v878
    %1466 = vmatpush.bf16.msra.mxu0 %v874
    %1467 = vmatpush.bf16.msra.mxu0 %v870
    %1468 = vmatmul.bf16.gmra.mxu0 %v67
    %v1469 = vpop.f32.mrf.mxu0
    %v1470 = vadd.f32 %v274, %v1469
    %v1471 = vpop.f32.mrf.mxu0
    %v1472 = vadd.f32 %v274, %v1471
    %1473 = vdwg.mxu0
    %1474 = vmatpush.bf16.msra.mxu0 %v930
    %1475 = vmatpush.bf16.msra.mxu0 %v926
    %1476 = vmatpush.bf16.msra.mxu0 %v922
    %1477 = vmatpush.bf16.msra.mxu0 %v918
    %1478 = vmatpush.bf16.msra.mxu0 %v914
    %1479 = vmatpush.bf16.msra.mxu0 %v910
    %1480 = vmatpush.bf16.msra.mxu0 %v906
    %1481 = vmatpush.bf16.msra.mxu0 %v902
    %1482 = vmatmul.bf16.gmra.mxu0 %v68
    %v1483 = vpop.f32.mrf.mxu0
    %v1484 = vadd.f32 %v1470, %v1483
    %v1485 = vpop.f32.mrf.mxu0
    %v1486 = vadd.f32 %v1472, %v1485
    %1487 = vdwg.mxu0
    %1488 = vmatpush.bf16.msra.mxu0 %v962
    %1489 = vmatpush.bf16.msra.mxu0 %v958
    %1490 = vmatpush.bf16.msra.mxu0 %v954
    %1491 = vmatpush.bf16.msra.mxu0 %v950
    %1492 = vmatpush.bf16.msra.mxu0 %v946
    %1493 = vmatpush.bf16.msra.mxu0 %v942
    %1494 = vmatpush.bf16.msra.mxu0 %v938
    %1495 = vmatpush.bf16.msra.mxu0 %v934
    %1496 = vmatmul.bf16.gmra.mxu0 %v69
    %v1497 = vpop.f32.mrf.mxu0
    %v1498 = vadd.f32 %v1484, %v1497
    %v1499 = vpop.f32.mrf.mxu0
    %v1500 = vadd.f32 %v1486, %v1499
    %1501 = vdwg.mxu0
    %1502 = vmatpush.bf16.msra.mxu0 %v994
    %1503 = vmatpush.bf16.msra.mxu0 %v990
    %1504 = vmatpush.bf16.msra.mxu0 %v986
    %1505 = vmatpush.bf16.msra.mxu0 %v982
    %1506 = vmatpush.bf16.msra.mxu0 %v978
    %1507 = vmatpush.bf16.msra.mxu0 %v974
    %1508 = vmatpush.bf16.msra.mxu0 %v970
    %1509 = vmatpush.bf16.msra.mxu0 %v966
    %1510 = vmatmul.bf16.gmra.mxu0 %v70
    %v1511 = vpop.f32.mrf.mxu0
    %v1512 = vadd.f32 %v1498, %v1511
    %v1513 = vpop.f32.mrf.mxu0
    %v1514 = vadd.f32 %v1500, %v1513
    %1515 = vdwg.mxu0
    %1516 = vmatpush.bf16.msra.mxu0 %v1026
    %1517 = vmatpush.bf16.msra.mxu0 %v1022
    %1518 = vmatpush.bf16.msra.mxu0 %v1018
    %1519 = vmatpush.bf16.msra.mxu0 %v1014
    %1520 = vmatpush.bf16.msra.mxu0 %v1010
    %1521 = vmatpush.bf16.msra.mxu0 %v1006
    %1522 = vmatpush.bf16.msra.mxu0 %v1002
    %1523 = vmatpush.bf16.msra.mxu0 %v998
    %1524 = vmatmul.bf16.gmra.mxu0 %v71
    %v1525 = vpop.f32.mrf.mxu0
    %v1526 = vadd.f32 %v1512, %v1525
    %v1527 = vpop.f32.mrf.mxu0
    %v1528 = vadd.f32 %v1514, %v1527
    %1529 = vdwg.mxu0
    %1530 = vmatpush.bf16.msra.mxu0 %v1058
    %1531 = vmatpush.bf16.msra.mxu0 %v1054
    %1532 = vmatpush.bf16.msra.mxu0 %v1050
    %1533 = vmatpush.bf16.msra.mxu0 %v1046
    %1534 = vmatpush.bf16.msra.mxu0 %v1042
    %1535 = vmatpush.bf16.msra.mxu0 %v1038
    %1536 = vmatpush.bf16.msra.mxu0 %v1034
    %1537 = vmatpush.bf16.msra.mxu0 %v1030
    %1538 = vmatmul.bf16.gmra.mxu0 %v72
    %v1539 = vpop.f32.mrf.mxu0
    %v1540 = vadd.f32 %v1526, %v1539
    %v1541 = vpop.f32.mrf.mxu0
    %v1542 = vadd.f32 %v1528, %v1541
    %1543 = vdwg.mxu0
    %1544 = vmatpush.bf16.msra.mxu0 0
    %1545 = vmatpush.bf16.msra.mxu0 0
    %1546 = vmatpush.bf16.msra.mxu0 0
    %1547 = vmatpush.bf16.msra.mxu0 0
    %1548 = vmatpush.bf16.msra.mxu0 0
    %1549 = vmatpush.bf16.msra.mxu0 0
    %1550 = vmatpush.bf16.msra.mxu0 0
    %1551 = vmatpush.bf16.msra.mxu0 %v1062
    %1552 = vmatmul.bf16.gmra.mxu0 %v1262
    %v1553 = vpop.f32.mrf.mxu0
    %v1554 = vadd.f32 %v1540, %v1553
    %v1555 = vpop.f32.mrf.mxu0
    %v1556 = vadd.f32 %v1542, %v1555
    %1557 = vdwg.mxu0
    %1558 = vmatpush.bf16.msra.mxu0 %v899
    %1559 = vmatpush.bf16.msra.mxu0 %v895
    %1560 = vmatpush.bf16.msra.mxu0 %v891
    %1561 = vmatpush.bf16.msra.mxu0 %v887
    %1562 = vmatpush.bf16.msra.mxu0 %v883
    %1563 = vmatpush.bf16.msra.mxu0 %v879
    %1564 = vmatpush.bf16.msra.mxu0 %v875
    %1565 = vmatpush.bf16.msra.mxu0 %v871
    %1566 = vmatmul.bf16.gmra.mxu0 %v67
    %v1567 = vpop.f32.mrf.mxu0
    %v1568 = vadd.f32 %v275, %v1567
    %v1569 = vpop.f32.mrf.mxu0
    %v1570 = vadd.f32 %v275, %v1569
    %1571 = vdwg.mxu0
    %1572 = vmatpush.bf16.msra.mxu0 %v931
    %1573 = vmatpush.bf16.msra.mxu0 %v927
    %1574 = vmatpush.bf16.msra.mxu0 %v923
    %1575 = vmatpush.bf16.msra.mxu0 %v919
    %1576 = vmatpush.bf16.msra.mxu0 %v915
    %1577 = vmatpush.bf16.msra.mxu0 %v911
    %1578 = vmatpush.bf16.msra.mxu0 %v907
    %1579 = vmatpush.bf16.msra.mxu0 %v903
    %1580 = vmatmul.bf16.gmra.mxu0 %v68
    %v1581 = vpop.f32.mrf.mxu0
    %v1582 = vadd.f32 %v1568, %v1581
    %v1583 = vpop.f32.mrf.mxu0
    %v1584 = vadd.f32 %v1570, %v1583
    %1585 = vdwg.mxu0
    %1586 = vmatpush.bf16.msra.mxu0 %v963
    %1587 = vmatpush.bf16.msra.mxu0 %v959
    %1588 = vmatpush.bf16.msra.mxu0 %v955
    %1589 = vmatpush.bf16.msra.mxu0 %v951
    %1590 = vmatpush.bf16.msra.mxu0 %v947
    %1591 = vmatpush.bf16.msra.mxu0 %v943
    %1592 = vmatpush.bf16.msra.mxu0 %v939
    %1593 = vmatpush.bf16.msra.mxu0 %v935
    %1594 = vmatmul.bf16.gmra.mxu0 %v69
    %v1595 = vpop.f32.mrf.mxu0
    %v1596 = vadd.f32 %v1582, %v1595
    %v1597 = vpop.f32.mrf.mxu0
    %v1598 = vadd.f32 %v1584, %v1597
    %1599 = vdwg.mxu0
    %1600 = vmatpush.bf16.msra.mxu0 %v995
    %1601 = vmatpush.bf16.msra.mxu0 %v991
    %1602 = vmatpush.bf16.msra.mxu0 %v987
    %1603 = vmatpush.bf16.msra.mxu0 %v983
    %1604 = vmatpush.bf16.msra.mxu0 %v979
    %1605 = vmatpush.bf16.msra.mxu0 %v975
    %1606 = vmatpush.bf16.msra.mxu0 %v971
    %1607 = vmatpush.bf16.msra.mxu0 %v967
    %1608 = vmatmul.bf16.gmra.mxu0 %v70
    %v1609 = vpop.f32.mrf.mxu0
    %v1610 = vadd.f32 %v1596, %v1609
    %v1611 = vpop.f32.mrf.mxu0
    %v1612 = vadd.f32 %v1598, %v1611
    %1613 = vdwg.mxu0
    %1614 = vmatpush.bf16.msra.mxu0 %v1027
    %1615 = vmatpush.bf16.msra.mxu0 %v1023
    %1616 = vmatpush.bf16.msra.mxu0 %v1019
    %1617 = vmatpush.bf16.msra.mxu0 %v1015
    %1618 = vmatpush.bf16.msra.mxu0 %v1011
    %1619 = vmatpush.bf16.msra.mxu0 %v1007
    %1620 = vmatpush.bf16.msra.mxu0 %v1003
    %1621 = vmatpush.bf16.msra.mxu0 %v999
    %1622 = vmatmul.bf16.gmra.mxu0 %v71
    %v1623 = vpop.f32.mrf.mxu0
    %v1624 = vadd.f32 %v1610, %v1623
    %v1625 = vpop.f32.mrf.mxu0
    %v1626 = vadd.f32 %v1612, %v1625
    %1627 = vdwg.mxu0
    %1628 = vmatpush.bf16.msra.mxu0 %v1059
    %1629 = vmatpush.bf16.msra.mxu0 %v1055
    %1630 = vmatpush.bf16.msra.mxu0 %v1051
    %1631 = vmatpush.bf16.msra.mxu0 %v1047
    %1632 = vmatpush.bf16.msra.mxu0 %v1043
    %1633 = vmatpush.bf16.msra.mxu0 %v1039
    %1634 = vmatpush.bf16.msra.mxu0 %v1035
    %1635 = vmatpush.bf16.msra.mxu0 %v1031
    %1636 = vmatmul.bf16.gmra.mxu0 %v72
    %v1637 = vpop.f32.mrf.mxu0
    %v1638 = vadd.f32 %v1624, %v1637
    %v1639 = vpop.f32.mrf.mxu0
    %v1640 = vadd.f32 %v1626, %v1639
    %1641 = vdwg.mxu0
    %1642 = vmatpush.bf16.msra.mxu0 0
    %1643 = vmatpush.bf16.msra.mxu0 0
    %1644 = vmatpush.bf16.msra.mxu0 0
    %1645 = vmatpush.bf16.msra.mxu0 0
    %1646 = vmatpush.bf16.msra.mxu0 0
    %1647 = vmatpush.bf16.msra.mxu0 0
    %1648 = vmatpush.bf16.msra.mxu0 0
    %1649 = vmatpush.bf16.msra.mxu0 %v1063
    %1650 = vmatmul.bf16.gmra.mxu0 %v1262
    %v1651 = vpop.f32.mrf.mxu0
    %v1652 = vadd.f32 %v1638, %v1651
    %v1653 = vpop.f32.mrf.mxu0
    %v1654 = vadd.f32 %v1640, %v1653
    %1655 = vdwg.mxu0
    %v1656 = vmax.f32 %v1358, 0.0
    %v1657 = vmax.f32 %v1456, 0.0
    %v1658 = vmax.f32 %v1554, 0.0
    %v1659 = vmax.f32 %v1652, 0.0
    %v1660 = vmax.f32 %v1360, 0.0
    %v1661 = vmax.f32 %v1458, 0.0
    %v1662 = vmax.f32 %v1556, 0.0
    %v1663 = vmax.f32 %v1654, 0.0
    %v1664 = vpack.c.bf16 %v1660, %v1656
    %v1665 = vpack.c.bf16 %v1661, %v1657
    %v1666 = vpack.c.bf16 %v1662, %v1658
    %v1667 = vpack.c.bf16 %v1663, %v1659
    %v1668 = vld [vmem:[#allocation4] sm:$0xf]
    %v1669 = vld [vmem:[#allocation4 + $0x4] sm:$0xf]
    %v1670 = vld [vmem:[#allocation4 + $0x8] sm:$0xf]
    %v1671 = vld [vmem:[#allocation4 + $0xc] sm:$0xf]
    %v1672 = vld [vmem:[#allocation4 + $0x10] sm:$0xf]
    %v1673 = vld [vmem:[#allocation4 + $0x14] sm:$0xf]
    %v1674 = vld [vmem:[#allocation4 + $0x18] sm:$0xf]
    %v1675 = vld [vmem:[#allocation4 + $0x1c] sm:$0xf]
    %v1676 = vld [vmem:[#allocation4 + $0x20] sm:$0xf]
    %v1677 = vld [vmem:[#allocation4 + $0x24] sm:$0xf]
    %v1678 = vld [vmem:[#allocation4 + $0x28] sm:$0xf]
    %v1679 = vld [vmem:[#allocation4 + $0x2c] sm:$0xf]
    %v1680 = vld [vmem:[#allocation4 + $0x30] sm:$0xf]
    %v1681 = vld [vmem:[#allocation4 + $0x34] sm:$0xf]
    %v1682 = vld [vmem:[#allocation4 + $0x38] sm:$0xf]
    %v1683 = vld [vmem:[#allocation4 + $0x3c] sm:$0xf]
    %v1684 = vld [vmem:[#allocation4 + $0x40] sm:$0xf]
    %v1685 = vld [vmem:[#allocation4 + $0x44] sm:$0xf]
    %v1686 = vld [vmem:[#allocation4 + $0x48] sm:$0xf]
    %v1687 = vld [vmem:[#allocation4 + $0x4c] sm:$0xf]
    %v1688 = vld [vmem:[#allocation4 + $0x50] sm:$0xf]
    %v1689 = vld [vmem:[#allocation4 + $0x54] sm:$0xf]
    %v1690 = vld [vmem:[#allocation4 + $0x58] sm:$0xf]
    %v1691 = vld [vmem:[#allocation4 + $0x5c] sm:$0xf]
    %v1692 = vld [vmem:[#allocation4 + $0x60] sm:$0xf]
    %v1693 = vld [vmem:[#allocation4 + $0x64] sm:$0xf]
    %v1694 = vld [vmem:[#allocation4 + $0x68] sm:$0xf]
    %v1695 = vld [vmem:[#allocation4 + $0x6c] sm:$0xf]
    %v1696 = vld [vmem:[#allocation4 + $0x70] sm:$0xf]
    %v1697 = vld [vmem:[#allocation4 + $0x74] sm:$0xf]
    %v1698 = vld [vmem:[#allocation4 + $0x78] sm:$0xf]
    %v1699 = vld [vmem:[#allocation4 + $0x7c] sm:$0xf]
    %v1700 = vld [vmem:[#allocation4 + $0x80] sm:$0xf]
    %v1701 = vld [vmem:[#allocation4 + $0x84] sm:$0xf]
    %v1702 = vld [vmem:[#allocation4 + $0x88] sm:$0xf]
    %v1703 = vld [vmem:[#allocation4 + $0x8c] sm:$0xf]
    %v1704 = vld [vmem:[#allocation4 + $0x90] sm:$0xf]
    %v1705 = vld [vmem:[#allocation4 + $0x94] sm:$0xf]
    %v1706 = vld [vmem:[#allocation4 + $0x98] sm:$0xf]
    %v1707 = vld [vmem:[#allocation4 + $0x9c] sm:$0xf]
    %v1708 = vld [vmem:[#allocation4 + $0xa0] sm:$0xf]
    %v1709 = vld [vmem:[#allocation4 + $0xa4] sm:$0xf]
    %v1710 = vld [vmem:[#allocation4 + $0xa8] sm:$0xf]
    %v1711 = vld [vmem:[#allocation4 + $0xac] sm:$0xf]
    %v1712 = vld [vmem:[#allocation4 + $0xb0] sm:$0xf]
    %v1713 = vld [vmem:[#allocation4 + $0xb4] sm:$0xf]
    %v1714 = vld [vmem:[#allocation4 + $0xb8] sm:$0xf]
    %v1715 = vld [vmem:[#allocation4 + $0xbc] sm:$0xf]
    %v1716 = vld [vmem:[#allocation4 + $0xc0] sm:$0xf]
    %v1717 = vld [vmem:[#allocation4 + $0xc4] sm:$0xf]
    %v1718 = vld [vmem:[#allocation4 + $0xc8] sm:$0xf]
    %v1719 = vld [vmem:[#allocation4 + $0xcc] sm:$0xf]
    %v1720 = vld [vmem:[#allocation4 + $0xd0] sm:$0xf]
    %v1721 = vld [vmem:[#allocation4 + $0xd4] sm:$0xf]
    %v1722 = vld [vmem:[#allocation4 + $0xd8] sm:$0xf]
    %v1723 = vld [vmem:[#allocation4 + $0xdc] sm:$0xf]
    %v1724 = vld [vmem:[#allocation4 + $0xe0] sm:$0xf]
    %v1725 = vld [vmem:[#allocation4 + $0xe4] sm:$0xf]
    %v1726 = vld [vmem:[#allocation4 + $0xe8] sm:$0xf]
    %v1727 = vld [vmem:[#allocation4 + $0xec] sm:$0xf]
    %v1728 = vld [vmem:[#allocation4 + $0xf0] sm:$0xf]
    %v1729 = vld [vmem:[#allocation4 + $0xf4] sm:$0xf]
    %v1730 = vld [vmem:[#allocation4 + $0xf8] sm:$0xf]
    %v1731 = vld [vmem:[#allocation4 + $0xfc] sm:$0xf]
    %v1732 = vld [vmem:[%s4] sm:$0x1]
    %v1734 = vperm.slane %v1732, 0
    %v1800 = vunpack.c.l.b16 %v1668
    %v1801 = vunpack.c.l.b16 %v1669
    %v1802 = vunpack.c.l.b16 %v1670
    %v1803 = vunpack.c.l.b16 %v1671
    %v1804 = vunpack.c.l.b16 %v1672
    %v1805 = vunpack.c.l.b16 %v1673
    %v1806 = vunpack.c.l.b16 %v1674
    %v1807 = vunpack.c.l.b16 %v1675
    %v1808 = vunpack.c.l.b16 %v1676
    %v1809 = vunpack.c.l.b16 %v1677
    %v1810 = vunpack.c.l.b16 %v1678
    %v1811 = vunpack.c.l.b16 %v1679
    %v1812 = vunpack.c.l.b16 %v1680
    %v1813 = vunpack.c.l.b16 %v1681
    %v1814 = vunpack.c.l.b16 %v1682
    %v1815 = vunpack.c.l.b16 %v1683
    %v1816 = vunpack.c.l.b16 %v1684
    %v1817 = vunpack.c.l.b16 %v1685
    %v1818 = vunpack.c.l.b16 %v1686
    %v1819 = vunpack.c.l.b16 %v1687
    %v1820 = vunpack.c.l.b16 %v1688
    %v1821 = vunpack.c.l.b16 %v1689
    %v1822 = vunpack.c.l.b16 %v1690
    %v1823 = vunpack.c.l.b16 %v1691
    %v1824 = vunpack.c.l.b16 %v1692
    %v1825 = vunpack.c.l.b16 %v1693
    %v1826 = vunpack.c.l.b16 %v1694
    %v1827 = vunpack.c.l.b16 %v1695
    %v1828 = vunpack.c.l.b16 %v1696
    %v1829 = vunpack.c.l.b16 %v1697
    %v1830 = vunpack.c.l.b16 %v1698
    %v1831 = vunpack.c.l.b16 %v1699
    %v1832 = vunpack.c.l.b16 %v1700
    %v1833 = vunpack.c.l.b16 %v1701
    %v1834 = vunpack.c.l.b16 %v1702
    %v1835 = vunpack.c.l.b16 %v1703
    %v1836 = vunpack.c.l.b16 %v1704
    %v1837 = vunpack.c.l.b16 %v1705
    %v1838 = vunpack.c.l.b16 %v1706
    %v1839 = vunpack.c.l.b16 %v1707
    %v1840 = vunpack.c.l.b16 %v1708
    %v1841 = vunpack.c.l.b16 %v1709
    %v1842 = vunpack.c.l.b16 %v1710
    %v1843 = vunpack.c.l.b16 %v1711
    %v1844 = vunpack.c.l.b16 %v1712
    %v1845 = vunpack.c.l.b16 %v1713
    %v1846 = vunpack.c.l.b16 %v1714
    %v1847 = vunpack.c.l.b16 %v1715
    %v1848 = vunpack.c.l.b16 %v1716
    %v1849 = vunpack.c.l.b16 %v1717
    %v1850 = vunpack.c.l.b16 %v1718
    %v1851 = vunpack.c.l.b16 %v1719
    %v1852 = vunpack.c.l.b16 %v1720
    %v1853 = vunpack.c.l.b16 %v1721
    %v1854 = vunpack.c.l.b16 %v1722
    %v1855 = vunpack.c.l.b16 %v1723
    %v1856 = vunpack.c.l.b16 %v1724
    %v1857 = vunpack.c.l.b16 %v1725
    %v1858 = vunpack.c.l.b16 %v1726
    %v1859 = vunpack.c.l.b16 %v1727
    %v1860 = vunpack.c.l.b16 %v1728
    %v1861 = vunpack.c.l.b16 %v1729
    %v1862 = vunpack.c.l.b16 %v1730
    %v1863 = vunpack.c.l.b16 %v1731
    %v1864 = vpack.c.b16 %v1801, %v1800
    %v1865 = vpack.c.b16 %v1803, %v1802
    %v1866 = vpack.c.b16 %v1805, %v1804
    %v1867 = vpack.c.b16 %v1807, %v1806
    %v1868 = vpack.c.b16 %v1809, %v1808
    %v1869 = vpack.c.b16 %v1811, %v1810
    %v1870 = vpack.c.b16 %v1813, %v1812
    %v1871 = vpack.c.b16 %v1815, %v1814
    %v1872 = vpack.c.b16 %v1817, %v1816
    %v1873 = vpack.c.b16 %v1819, %v1818
    %v1874 = vpack.c.b16 %v1821, %v1820
    %v1875 = vpack.c.b16 %v1823, %v1822
    %v1876 = vpack.c.b16 %v1825, %v1824
    %v1877 = vpack.c.b16 %v1827, %v1826
    %v1878 = vpack.c.b16 %v1829, %v1828
    %v1879 = vpack.c.b16 %v1831, %v1830
    %v1880 = vpack.c.b16 %v1833, %v1832
    %v1881 = vpack.c.b16 %v1835, %v1834
    %v1882 = vpack.c.b16 %v1837, %v1836
    %v1883 = vpack.c.b16 %v1839, %v1838
    %v1884 = vpack.c.b16 %v1841, %v1840
    %v1885 = vpack.c.b16 %v1843, %v1842
    %v1886 = vpack.c.b16 %v1845, %v1844
    %v1887 = vpack.c.b16 %v1847, %v1846
    %v1888 = vpack.c.b16 %v1849, %v1848
    %v1889 = vpack.c.b16 %v1851, %v1850
    %v1890 = vpack.c.b16 %v1853, %v1852
    %v1891 = vpack.c.b16 %v1855, %v1854
    %v1892 = vpack.c.b16 %v1857, %v1856
    %v1893 = vpack.c.b16 %v1859, %v1858
    %v1894 = vpack.c.b16 %v1861, %v1860
    %v1895 = vpack.c.b16 %v1863, %v1862
    %1928 = vmatpush.bf16.msra.mxu0 %v1871
    %1929 = vmatpush.bf16.msra.mxu0 %v1870
    %1930 = vmatpush.bf16.msra.mxu0 %v1869
    %1931 = vmatpush.bf16.msra.mxu0 %v1868
    %1932 = vmatpush.bf16.msra.mxu0 %v1867
    %1933 = vmatpush.bf16.msra.mxu0 %v1866
    %1934 = vmatpush.bf16.msra.mxu0 %v1865
    %1935 = vmatpush.bf16.msra.mxu0 %v1864
    %1936 = vmatmul.bf16.gmra.mxu0 %v1664
    %v1937 = vpop.f32.mrf.mxu0
    %v1938 = vadd.f32 %v1734, %v1937
    %v1939 = vpop.f32.mrf.mxu0
    %v1940 = vadd.f32 %v1734, %v1939
    %1941 = vdwg.mxu0
    %1942 = vmatpush.bf16.msra.mxu0 %v1879
    %1943 = vmatpush.bf16.msra.mxu0 %v1878
    %1944 = vmatpush.bf16.msra.mxu0 %v1877
    %1945 = vmatpush.bf16.msra.mxu0 %v1876
    %1946 = vmatpush.bf16.msra.mxu0 %v1875
    %1947 = vmatpush.bf16.msra.mxu0 %v1874
    %1948 = vmatpush.bf16.msra.mxu0 %v1873
    %1949 = vmatpush.bf16.msra.mxu0 %v1872
    %1950 = vmatmul.bf16.gmra.mxu0 %v1665
    %v1951 = vpop.f32.mrf.mxu0
    %v1952 = vadd.f32 %v1938, %v1951
    %v1953 = vpop.f32.mrf.mxu0
    %v1954 = vadd.f32 %v1940, %v1953
    %1955 = vdwg.mxu0
    %1956 = vmatpush.bf16.msra.mxu0 %v1887
    %1957 = vmatpush.bf16.msra.mxu0 %v1886
    %1958 = vmatpush.bf16.msra.mxu0 %v1885
    %1959 = vmatpush.bf16.msra.mxu0 %v1884
    %1960 = vmatpush.bf16.msra.mxu0 %v1883
    %1961 = vmatpush.bf16.msra.mxu0 %v1882
    %1962 = vmatpush.bf16.msra.mxu0 %v1881
    %1963 = vmatpush.bf16.msra.mxu0 %v1880
    %1964 = vmatmul.bf16.gmra.mxu0 %v1666
    %v1965 = vpop.f32.mrf.mxu0
    %v1966 = vadd.f32 %v1952, %v1965
    %v1967 = vpop.f32.mrf.mxu0
    %v1968 = vadd.f32 %v1954, %v1967
    %1969 = vdwg.mxu0
    %1970 = vmatpush.bf16.msra.mxu0 %v1895
    %1971 = vmatpush.bf16.msra.mxu0 %v1894
    %1972 = vmatpush.bf16.msra.mxu0 %v1893
    %1973 = vmatpush.bf16.msra.mxu0 %v1892
    %1974 = vmatpush.bf16.msra.mxu0 %v1891
    %1975 = vmatpush.bf16.msra.mxu0 %v1890
    %1976 = vmatpush.bf16.msra.mxu0 %v1889
    %1977 = vmatpush.bf16.msra.mxu0 %v1888
    %1978 = vmatmul.bf16.gmra.mxu0 %v1667
    %v1979 = vpop.f32.mrf.mxu0
    %v1980 = vadd.f32 %v1966, %v1979
    %v1981 = vpop.f32.mrf.mxu0
    %v1982 = vadd.f32 %v1968, %v1981
    %1983 = vdwg.mxu0
    %1984 = vst [vmem:[%s5] sm:$0xff] %v1980
    %1985 = vst [vmem:[%s5 + $0x8] sm:$0xff] %v1982
    // Predicated region
    $region30: #{net_forward.1} parent=1 // pred_check
      _
    $region31: #{net_forward.1} parent=1 // pred_check_branch
      %1987 = sbr.rel (0) target = $region33
    $region32: #{net_forward.1} parent=1 // pred_region
      _
    $region33: #{net_forward.1} parent=1 // pred_fallthru
      _
    // Predicated region
    $region34: #{net_forward.1} parent=1 // pred_check
      _
    $region35: #{net_forward.1} parent=1 // pred_check_branch
      %1989 = sbr.rel (0) target = $region37
    $region36: #{net_forward.1} parent=1 // pred_region
      _
    $region37: #{net_forward.1} parent=1 // pred_fallthru
      _
    %1990 = vsyncpa [#allocation3], 1
    %1991 = vsyncpa [#allocation5], 1

</llo_original>
